<compile_context>
chip_gen: v5e
topology: v5e:2x2
jax: 0.10.0
libtpu: 0.0.40
codegen_flags: <defaults>
</compile_context>

<pallas_src>
import functools
import math

import jax
import jax.numpy as jnp
from jax.experimental import pallas as pl
from jax.experimental.pallas import tpu as pltpu


# ------------------------- slab layout (static) ------------------------------

def _slab_layouts(D, F):
  """Column offsets of each logical weight inside the packed slabs."""
  def build(entries):
    off, c = {}, 0
    for name, n in entries:
      off[name] = (c, n)
      c += n
    return off, c

  w_off, w_cols = build([
      ("sa_w_in", 3 * D), ("sa_w_out", D), ("ca_w_q", D),
      ("ca_w_kv", 2 * D), ("ca_w_out", D), ("ff_w1", F),
  ])
  v_off, v_cols = build([
      ("sa_b_in", 3 * D), ("sa_b_out", D), ("ca_b_q", D),
      ("ca_b_kv", 2 * D), ("ca_b_out", D), ("ff_b1", F), ("ff_b2", D),
      ("ln1_g", D), ("ln1_b", D), ("ln2_g", D), ("ln2_b", D),
      ("ln3_g", D), ("ln3_b", D),
  ])
  return w_off, w_cols, v_off, v_cols


# ----------------------------- fused kernel ----------------------------------

def _decoder_layer_kernel(tgt_ref, mem_ref, w_d_ref, w_f_ref, vecs_ref, out_ref,
                          *, heads, eps):
  B, T, D = tgt_ref.shape
  S = mem_ref.shape[1]
  F = w_f_ref.shape[0]
  dh = D // heads
  w_off, _, v_off, _ = _slab_layouts(D, F)

  # Load every weight slice ONCE (static slices of resident VMEM slabs).
  w = {name: w_d_ref[:, s:s + n] for name, (s, n) in w_off.items()}
  v = {name: vecs_ref[:, s:s + n] for name, (s, n) in v_off.items()}
  w_ff2 = w_f_ref[...]

  def layer_norm(z, g, b):
    mu = jnp.mean(z, axis=-1, keepdims=True)
    var = jnp.mean((z - mu) ** 2, axis=-1, keepdims=True)
    return (z - mu) * jax.lax.rsqrt(var + eps) * g + b

  def mha(q, k, vv, w_out, b_out):
    # Softmax scale already folded into the Q projection weights/biases.
    ctx = []
    for h in range(heads):                       # static unroll (heads=4)
      sl = slice(h * dh, (h + 1) * dh)
      qh, kh, vh = q[:, sl], k[:, sl], vv[:, sl]
      # QK^T without an explicit transpose: contract trailing axes.
      s = jax.lax.dot_general(qh, kh, (((1,), (1,)), ((), ())),
                              preferred_element_type=jnp.float32)   # (T, S)
      s = s - jnp.max(s, axis=-1, keepdims=True)
      p = jnp.exp(s)
      p = p / jnp.sum(p, axis=-1, keepdims=True)                    # exact softmax
      ctx.append(jnp.dot(p, vh, preferred_element_type=jnp.float32))  # (T, dh)
    ctx = jnp.concatenate(ctx, axis=-1)          # (T, D) context, heads on lanes
    return jnp.dot(ctx, w_out, preferred_element_type=jnp.float32) + b_out

  for b in range(B):            # single grid step; static unroll over batch rows
    x = tgt_ref[b]              # (T, D)
    mem = mem_ref[b]            # (S, D)

    # ---- self-attention + residual + LayerNorm ------------------------------
    qkv = (jnp.dot(x, w["sa_w_in"], preferred_element_type=jnp.float32)
           + v["sa_b_in"])                                           # (T, 3D)
    sa = mha(qkv[:, :D], qkv[:, D:2 * D], qkv[:, 2 * D:],
             w["sa_w_out"], v["sa_b_out"])
    x = layer_norm(x + sa, v["ln1_g"], v["ln1_b"])

    # ---- cross-attention + residual + LayerNorm -----------------------------
    q = (jnp.dot(x, w["ca_w_q"], preferred_element_type=jnp.float32)
         + v["ca_b_q"])                                              # (T, D)
    kv = (jnp.dot(mem, w["ca_w_kv"], preferred_element_type=jnp.float32)
          + v["ca_b_kv"])                                            # (S, 2D)
    ca = mha(q, kv[:, :D], kv[:, D:], w["ca_w_out"], v["ca_b_out"])
    x = layer_norm(x + ca, v["ln2_g"], v["ln2_b"])

    # ---- feed-forward + residual + LayerNorm --------------------------------
    h1 = jnp.maximum(
        jnp.dot(x, w["ff_w1"], preferred_element_type=jnp.float32) + v["ff_b1"],
        0.0)                                                         # (T, F)
    y = jnp.dot(h1, w_ff2, preferred_element_type=jnp.float32) + v["ff_b2"]
    x = layer_norm(x + y, v["ln3_g"], v["ln3_b"])

    out_ref[b] = x


# -------------------------------- wrapper -------------------------------------

def decoder_layer(params, tgt, memory, heads):
  B, T, D = tgt.shape
  S = memory.shape[1]
  w_d, w_f, vecs = params["w_d"], params["w_f"], params["vecs"]
  F = w_f.shape[0]
  dh = D // heads

  # Advisory cost estimate (matmul flops dominate; exp + LN rsqrt as transcendentals).
  mm_flops = 2 * B * (
      T * D * 3 * D              # self-attn QKV projection
      + heads * T * T * dh * 2   # self-attn QK^T + PV
      + T * D * D                # self-attn out projection
      + T * D * D                # cross-attn Q projection
      + S * D * 2 * D            # cross-attn KV projection
      + heads * T * S * dh * 2   # cross-attn QK^T + PV
      + T * D * D                # cross-attn out projection
      + T * D * F + T * F * D)   # feed-forward
  transcendentals = B * (heads * T * (T + S) + 3 * T)
  bytes_accessed = 4 * (tgt.size + memory.size + w_d.size + w_f.size
                        + vecs.size + B * T * D)

  return pl.pallas_call(
      functools.partial(_decoder_layer_kernel, heads=heads, eps=1e-5),
      out_shape=jax.ShapeDtypeStruct((B, T, D), jnp.float32),
      grid=(1,),                                   # single step: whole problem resident
      in_specs=[
          pl.BlockSpec((B, T, D), lambda i: (0, 0, 0)),   # tgt
          pl.BlockSpec((B, S, D), lambda i: (0, 0, 0)),   # memory
          pl.BlockSpec(w_d.shape, lambda i: (0, 0)),      # packed (D, 8D+F) slab
          pl.BlockSpec(w_f.shape, lambda i: (0, 0)),      # (F, D) slab
          pl.BlockSpec(vecs.shape, lambda i: (0, 0)),     # packed bias/LN slab
      ],
      out_specs=pl.BlockSpec((B, T, D), lambda i: (0, 0, 0)),
      compiler_params=pltpu.CompilerParams(
          dimension_semantics=("arbitrary",)),
      cost_estimate=pl.CostEstimate(
          flops=mm_flops,
          transcendentals=transcendentals,
          bytes_accessed=bytes_accessed),
  )(tgt, memory, w_d, w_f, vecs)


# --------------------------------- params -------------------------------------

def init_decoder_layer_params(key, dim_model, heads, dim_ff):
  """Weights in matmul-ready layout (== torch weight.T), packed into 3 slabs.

  Packed QKV column order in sa_w_in is [q | k | v], i.e. PyTorch's
  in_proj_weight ([q; k; v] rows) transposed; ca_w_kv columns are [k | v].
  The 1/sqrt(dh) softmax scale is folded into the Q projection weight & bias.
  """
  D, F = dim_model, dim_ff
  dh = D // heads
  scale = 1.0 / math.sqrt(dh)
  ks = jax.random.split(key, 8)
  nrm = lambda k, shape: (0.02 * jax.random.normal(k, shape)).astype(jnp.float32)
  zeros = lambda *s: jnp.zeros(s, jnp.float32)
  ones = lambda *s: jnp.ones(s, jnp.float32)

  sa_w_in, sa_b_in = nrm(ks[0], (D, 3 * D)), zeros(1, 3 * D)
  sa_w_out, sa_b_out = nrm(ks[1], (D, D)), zeros(1, D)
  ca_w_q, ca_b_q = nrm(ks[2], (D, D)), zeros(1, D)
  ca_w_kv, ca_b_kv = nrm(ks[3], (D, 2 * D)), zeros(1, 2 * D)
  ca_w_out, ca_b_out = nrm(ks[4], (D, D)), zeros(1, D)
  ff_w1, ff_b1 = nrm(ks[5], (D, F)), nrm(ks[6], (1, F))
  ff_w2, ff_b2 = nrm(ks[7], (F, D)), zeros(1, D)

  # Fold attention softmax scale into Q projections (weight AND bias).
  sa_w_in = sa_w_in.at[:, :D].multiply(scale)
  sa_b_in = sa_b_in.at[:, :D].multiply(scale)
  ca_w_q = ca_w_q * scale
  ca_b_q = ca_b_q * scale

  named_w = {"sa_w_in": sa_w_in, "sa_w_out": sa_w_out, "ca_w_q": ca_w_q,
             "ca_w_kv": ca_w_kv, "ca_w_out": ca_w_out, "ff_w1": ff_w1}
  named_v = {"sa_b_in": sa_b_in, "sa_b_out": sa_b_out, "ca_b_q": ca_b_q,
             "ca_b_kv": ca_b_kv, "ca_b_out": ca_b_out, "ff_b1": ff_b1,
             "ff_b2": ff_b2,
             "ln1_g": ones(1, D), "ln1_b": zeros(1, D),
             "ln2_g": ones(1, D), "ln2_b": zeros(1, D),
             "ln3_g": ones(1, D), "ln3_b": zeros(1, D)}

  w_off, _, v_off, _ = _slab_layouts(D, F)
  w_order = [n for n, _ in sorted(w_off.items(), key=lambda kv: kv[1][0])]
  v_order = [n for n, _ in sorted(v_off.items(), key=lambda kv: kv[1][0])]
  return {
      "w_d": jnp.concatenate([named_w[n] for n in w_order], axis=1),   # (D, 8D+F)
      "w_f": ff_w2,                                                    # (F, D)
      "vecs": jnp.concatenate([named_v[n] for n in v_order], axis=1),  # (1, 15D+F)
  }


# ----------------------------------- main --------------------------------------

if __name__ == "__main__":
  dim_model, heads, dim_ff = 32, 4, 64
  B, T, S = 2, 8, 12

  root = jax.random.PRNGKey(0)
  k_params, k_tgt, k_mem = jax.random.split(root, 3)

  params = init_decoder_layer_params(k_params, dim_model, heads, dim_ff)
  tgt = jax.random.normal(k_tgt, (B, T, dim_model), dtype=jnp.float32)
  memory = jax.random.normal(k_mem, (B, S, dim_model), dtype=jnp.float32)

  fwd = jax.jit(lambda p, t, m: decoder_layer(p, t, m, heads))
  out = jax.block_until_ready(fwd(params, tgt, memory))

  assert out.shape == (B, T, dim_model)
  assert bool(jnp.all(jnp.isfinite(out)))
  print("KERNEL_OK")
</pallas_src>

<mosaic_0001>
module attributes {stable_mosaic.version = 11 : i64} {
  func.func @_decoder_layer_kernel(%arg0: i32, %arg1: memref<2x8x32xf32, #tpu.memory_space<vmem>>, %arg2: memref<2x12x32xf32, #tpu.memory_space<vmem>>, %arg3: memref<32x320xf32, #tpu.memory_space<vmem>>, %arg4: memref<64x32xf32, #tpu.memory_space<vmem>>, %arg5: memref<1x544xf32, #tpu.memory_space<vmem>>, %arg6: memref<2x8x32xf32, #tpu.memory_space<vmem>>) attributes {dimension_semantics = [#tpu.dimension_semantics<arbitrary>], iteration_bounds = array<i64: 1>, scalar_prefetch = 0 : i64, scratch_operands = 0 : i64, tpu.core_type = #tpu.core_type<tc>, window_params = [{pipeline_mode = #tpu.pipeline_mode<synchronous>, transform_indices = @transform_0, window_bounds = array<i64: 2, 8, 32>}, {pipeline_mode = #tpu.pipeline_mode<synchronous>, transform_indices = @transform_1, window_bounds = array<i64: 2, 12, 32>}, {pipeline_mode = #tpu.pipeline_mode<synchronous>, transform_indices = @transform_2, window_bounds = array<i64: 32, 320>}, {pipeline_mode = #tpu.pipeline_mode<synchronous>, transform_indices = @transform_3, window_bounds = array<i64: 64, 32>}, {pipeline_mode = #tpu.pipeline_mode<synchronous>, transform_indices = @transform_4, window_bounds = array<i64: 1, 544>}, {pipeline_mode = #tpu.pipeline_mode<synchronous>, transform_indices = @transform_5, window_bounds = array<i64: 2, 8, 32>}]} {
    %c0 = arith.constant 0 : index
    %c0_0 = arith.constant 0 : index
    %0 = vector.load %arg3[%c0, %c0_0] : memref<32x320xf32, #tpu.memory_space<vmem>>, vector<32x96xf32>
    %c0_1 = arith.constant 0 : index
    %c96 = arith.constant 96 : index
    %1 = vector.load %arg3[%c0_1, %c96] : memref<32x320xf32, #tpu.memory_space<vmem>>, vector<32x32xf32>
    %c0_2 = arith.constant 0 : index
    %c128 = arith.constant 128 : index
    %2 = vector.load %arg3[%c0_2, %c128] : memref<32x320xf32, #tpu.memory_space<vmem>>, vector<32x32xf32>
    %c0_3 = arith.constant 0 : index
    %c160 = arith.constant 160 : index
    %3 = vector.load %arg3[%c0_3, %c160] : memref<32x320xf32, #tpu.memory_space<vmem>>, vector<32x64xf32>
    %c0_4 = arith.constant 0 : index
    %c224 = arith.constant 224 : index
    %4 = vector.load %arg3[%c0_4, %c224] : memref<32x320xf32, #tpu.memory_space<vmem>>, vector<32x32xf32>
    %c0_5 = arith.constant 0 : index
    %c256 = arith.constant 256 : index
    %5 = vector.load %arg3[%c0_5, %c256] : memref<32x320xf32, #tpu.memory_space<vmem>>, vector<32x64xf32>
    %c0_6 = arith.constant 0 : index
    %c0_7 = arith.constant 0 : index
    %6 = vector.load %arg5[%c0_6, %c0_7] : memref<1x544xf32, #tpu.memory_space<vmem>>, vector<1x96xf32>
    %c0_8 = arith.constant 0 : index
    %c96_9 = arith.constant 96 : index
    %7 = vector.load %arg5[%c0_8, %c96_9] : memref<1x544xf32, #tpu.memory_space<vmem>>, vector<1x32xf32>
    %c0_10 = arith.constant 0 : index
    %c128_11 = arith.constant 128 : index
    %8 = vector.load %arg5[%c0_10, %c128_11] : memref<1x544xf32, #tpu.memory_space<vmem>>, vector<1x32xf32>
    %c0_12 = arith.constant 0 : index
    %c160_13 = arith.constant 160 : index
    %9 = vector.load %arg5[%c0_12, %c160_13] : memref<1x544xf32, #tpu.memory_space<vmem>>, vector<1x64xf32>
    %c0_14 = arith.constant 0 : index
    %c224_15 = arith.constant 224 : index
    %10 = vector.load %arg5[%c0_14, %c224_15] : memref<1x544xf32, #tpu.memory_space<vmem>>, vector<1x32xf32>
    %c0_16 = arith.constant 0 : index
    %c256_17 = arith.constant 256 : index
    %11 = vector.load %arg5[%c0_16, %c256_17] : memref<1x544xf32, #tpu.memory_space<vmem>>, vector<1x64xf32>
    %c0_18 = arith.constant 0 : index
    %c320 = arith.constant 320 : index
    %12 = vector.load %arg5[%c0_18, %c320] : memref<1x544xf32, #tpu.memory_space<vmem>>, vector<1x32xf32>
    %c0_19 = arith.constant 0 : index
    %c352 = arith.constant 352 : index
    %13 = vector.load %arg5[%c0_19, %c352] : memref<1x544xf32, #tpu.memory_space<vmem>>, vector<1x32xf32>
    %c0_20 = arith.constant 0 : index
    %c384 = arith.constant 384 : index
    %14 = vector.load %arg5[%c0_20, %c384] : memref<1x544xf32, #tpu.memory_space<vmem>>, vector<1x32xf32>
    %c0_21 = arith.constant 0 : index
    %c416 = arith.constant 416 : index
    %15 = vector.load %arg5[%c0_21, %c416] : memref<1x544xf32, #tpu.memory_space<vmem>>, vector<1x32xf32>
    %c0_22 = arith.constant 0 : index
    %c448 = arith.constant 448 : index
    %16 = vector.load %arg5[%c0_22, %c448] : memref<1x544xf32, #tpu.memory_space<vmem>>, vector<1x32xf32>
    %c0_23 = arith.constant 0 : index
    %c480 = arith.constant 480 : index
    %17 = vector.load %arg5[%c0_23, %c480] : memref<1x544xf32, #tpu.memory_space<vmem>>, vector<1x32xf32>
    %c0_24 = arith.constant 0 : index
    %c512 = arith.constant 512 : index
    %18 = vector.load %arg5[%c0_24, %c512] : memref<1x544xf32, #tpu.memory_space<vmem>>, vector<1x32xf32>
    %c0_25 = arith.constant 0 : index
    %c0_26 = arith.constant 0 : index
    %19 = vector.load %arg4[%c0_25, %c0_26] : memref<64x32xf32, #tpu.memory_space<vmem>>, vector<64x32xf32>
    %c0_27 = arith.constant 0 : index
    %c0_28 = arith.constant 0 : index
    %c0_29 = arith.constant 0 : index
    %20 = vector.load %arg1[%c0_27, %c0_28, %c0_29] : memref<2x8x32xf32, #tpu.memory_space<vmem>>, vector<1x8x32xf32>
    %21 = vector.shape_cast %20 : vector<1x8x32xf32> to vector<8x32xf32>
    %c0_30 = arith.constant 0 : index
    %c0_31 = arith.constant 0 : index
    %c0_32 = arith.constant 0 : index
    %22 = vector.load %arg2[%c0_30, %c0_31, %c0_32] : memref<2x12x32xf32, #tpu.memory_space<vmem>>, vector<1x12x32xf32>
    %23 = vector.shape_cast %22 : vector<1x12x32xf32> to vector<12x32xf32>
    %cst = arith.constant dense<0.000000e+00> : vector<8x96xf32>
    %24 = tpu.matmul %21, %0, %cst {dimension_numbers = #tpu.dot_dimension_numbers<[1], [0], [0], [1], [0, 0, 1, 1], [], []>} : vector<8x32xf32>, vector<32x96xf32>, vector<8x96xf32> -> vector<8x96xf32>
    %25 = vector.broadcast %6 : vector<1x96xf32> to vector<8x96xf32>
    %26 = arith.addf %24, %25 : vector<8x96xf32>
    %27 = vector.extract_strided_slice %26 {offsets = [0, 0], sizes = [8, 32], strides = [1, 1]} : vector<8x96xf32> to vector<8x32xf32>
    %28 = vector.extract_strided_slice %26 {offsets = [0, 32], sizes = [8, 32], strides = [1, 1]} : vector<8x96xf32> to vector<8x32xf32>
    %29 = vector.extract_strided_slice %26 {offsets = [0, 64], sizes = [8, 32], strides = [1, 1]} : vector<8x96xf32> to vector<8x32xf32>
    %30 = vector.extract_strided_slice %27 {offsets = [0, 0], sizes = [8, 8], strides = [1, 1]} : vector<8x32xf32> to vector<8x8xf32>
    %31 = vector.extract_strided_slice %28 {offsets = [0, 0], sizes = [8, 8], strides = [1, 1]} : vector<8x32xf32> to vector<8x8xf32>
    %32 = vector.extract_strided_slice %29 {offsets = [0, 0], sizes = [8, 8], strides = [1, 1]} : vector<8x32xf32> to vector<8x8xf32>
    %cst_33 = arith.constant dense<0.000000e+00> : vector<8x8xf32>
    %33 = tpu.matmul %30, %31, %cst_33 {dimension_numbers = #tpu.dot_dimension_numbers<[1], [1], [0], [0], [0, 0, 1, 0], [], []>} : vector<8x8xf32>, vector<8x8xf32>, vector<8x8xf32> -> vector<8x8xf32>
    %cst_34 = arith.constant dense<0xFF800000> : vector<8xf32>
    %34 = vector.multi_reduction <maximumf>, %33, %cst_34 [1] : vector<8x8xf32> to vector<8xf32>
    %35 = vector.shape_cast %34 : vector<8xf32> to vector<8x1xf32>
    %36 = vector.broadcast %35 : vector<8x1xf32> to vector<8x8xf32>
    %37 = arith.subf %33, %36 : vector<8x8xf32>
    %38 = math.exp %37 : vector<8x8xf32>
    %cst_35 = arith.constant dense<0.000000e+00> : vector<8xf32>
    %39 = vector.multi_reduction <add>, %38, %cst_35 [1] : vector<8x8xf32> to vector<8xf32>
    %40 = vector.shape_cast %39 : vector<8xf32> to vector<8x1xf32>
    %41 = vector.broadcast %40 : vector<8x1xf32> to vector<8x8xf32>
    %42 = arith.divf %38, %41 : vector<8x8xf32>
    %cst_36 = arith.constant dense<0.000000e+00> : vector<8x8xf32>
    %43 = tpu.matmul %42, %32, %cst_36 {dimension_numbers = #tpu.dot_dimension_numbers<[1], [0], [0], [1], [0, 0, 1, 1], [], []>} : vector<8x8xf32>, vector<8x8xf32>, vector<8x8xf32> -> vector<8x8xf32>
    %44 = vector.extract_strided_slice %27 {offsets = [0, 8], sizes = [8, 8], strides = [1, 1]} : vector<8x32xf32> to vector<8x8xf32>
    %45 = vector.extract_strided_slice %28 {offsets = [0, 8], sizes = [8, 8], strides = [1, 1]} : vector<8x32xf32> to vector<8x8xf32>
    %46 = vector.extract_strided_slice %29 {offsets = [0, 8], sizes = [8, 8], strides = [1, 1]} : vector<8x32xf32> to vector<8x8xf32>
    %cst_37 = arith.constant dense<0.000000e+00> : vector<8x8xf32>
    %47 = tpu.matmul %44, %45, %cst_37 {dimension_numbers = #tpu.dot_dimension_numbers<[1], [1], [0], [0], [0, 0, 1, 0], [], []>} : vector<8x8xf32>, vector<8x8xf32>, vector<8x8xf32> -> vector<8x8xf32>
    %cst_38 = arith.constant dense<0xFF800000> : vector<8xf32>
    %48 = vector.multi_reduction <maximumf>, %47, %cst_38 [1] : vector<8x8xf32> to vector<8xf32>
    %49 = vector.shape_cast %48 : vector<8xf32> to vector<8x1xf32>
    %50 = vector.broadcast %49 : vector<8x1xf32> to vector<8x8xf32>
    %51 = arith.subf %47, %50 : vector<8x8xf32>
    %52 = math.exp %51 : vector<8x8xf32>
    %cst_39 = arith.constant dense<0.000000e+00> : vector<8xf32>
    %53 = vector.multi_reduction <add>, %52, %cst_39 [1] : vector<8x8xf32> to vector<8xf32>
    %54 = vector.shape_cast %53 : vector<8xf32> to vector<8x1xf32>
    %55 = vector.broadcast %54 : vector<8x1xf32> to vector<8x8xf32>
    %56 = arith.divf %52, %55 : vector<8x8xf32>
    %cst_40 = arith.constant dense<0.000000e+00> : vector<8x8xf32>
    %57 = tpu.matmul %56, %46, %cst_40 {dimension_numbers = #tpu.dot_dimension_numbers<[1], [0], [0], [1], [0, 0, 1, 1], [], []>} : vector<8x8xf32>, vector<8x8xf32>, vector<8x8xf32> -> vector<8x8xf32>
    %58 = vector.extract_strided_slice %27 {offsets = [0, 16], sizes = [8, 8], strides = [1, 1]} : vector<8x32xf32> to vector<8x8xf32>
    %59 = vector.extract_strided_slice %28 {offsets = [0, 16], sizes = [8, 8], strides = [1, 1]} : vector<8x32xf32> to vector<8x8xf32>
    %60 = vector.extract_strided_slice %29 {offsets = [0, 16], sizes = [8, 8], strides = [1, 1]} : vector<8x32xf32> to vector<8x8xf32>
    %cst_41 = arith.constant dense<0.000000e+00> : vector<8x8xf32>
    %61 = tpu.matmul %58, %59, %cst_41 {dimension_numbers = #tpu.dot_dimension_numbers<[1], [1], [0], [0], [0, 0, 1, 0], [], []>} : vector<8x8xf32>, vector<8x8xf32>, vector<8x8xf32> -> vector<8x8xf32>
    %cst_42 = arith.constant dense<0xFF800000> : vector<8xf32>
    %62 = vector.multi_reduction <maximumf>, %61, %cst_42 [1] : vector<8x8xf32> to vector<8xf32>
    %63 = vector.shape_cast %62 : vector<8xf32> to vector<8x1xf32>
    %64 = vector.broadcast %63 : vector<8x1xf32> to vector<8x8xf32>
    %65 = arith.subf %61, %64 : vector<8x8xf32>
    %66 = math.exp %65 : vector<8x8xf32>
    %cst_43 = arith.constant dense<0.000000e+00> : vector<8xf32>
    %67 = vector.multi_reduction <add>, %66, %cst_43 [1] : vector<8x8xf32> to vector<8xf32>
    %68 = vector.shape_cast %67 : vector<8xf32> to vector<8x1xf32>
    %69 = vector.broadcast %68 : vector<8x1xf32> to vector<8x8xf32>
    %70 = arith.divf %66, %69 : vector<8x8xf32>
    %cst_44 = arith.constant dense<0.000000e+00> : vector<8x8xf32>
    %71 = tpu.matmul %70, %60, %cst_44 {dimension_numbers = #tpu.dot_dimension_numbers<[1], [0], [0], [1], [0, 0, 1, 1], [], []>} : vector<8x8xf32>, vector<8x8xf32>, vector<8x8xf32> -> vector<8x8xf32>
    %72 = vector.extract_strided_slice %27 {offsets = [0, 24], sizes = [8, 8], strides = [1, 1]} : vector<8x32xf32> to vector<8x8xf32>
    %73 = vector.extract_strided_slice %28 {offsets = [0, 24], sizes = [8, 8], strides = [1, 1]} : vector<8x32xf32> to vector<8x8xf32>
    %74 = vector.extract_strided_slice %29 {offsets = [0, 24], sizes = [8, 8], strides = [1, 1]} : vector<8x32xf32> to vector<8x8xf32>
    %cst_45 = arith.constant dense<0.000000e+00> : vector<8x8xf32>
    %75 = tpu.matmul %72, %73, %cst_45 {dimension_numbers = #tpu.dot_dimension_numbers<[1], [1], [0], [0], [0, 0, 1, 0], [], []>} : vector<8x8xf32>, vector<8x8xf32>, vector<8x8xf32> -> vector<8x8xf32>
    %cst_46 = arith.constant dense<0xFF800000> : vector<8xf32>
    %76 = vector.multi_reduction <maximumf>, %75, %cst_46 [1] : vector<8x8xf32> to vector<8xf32>
    %77 = vector.shape_cast %76 : vector<8xf32> to vector<8x1xf32>
    %78 = vector.broadcast %77 : vector<8x1xf32> to vector<8x8xf32>
    %79 = arith.subf %75, %78 : vector<8x8xf32>
    %80 = math.exp %79 : vector<8x8xf32>
    %cst_47 = arith.constant dense<0.000000e+00> : vector<8xf32>
    %81 = vector.multi_reduction <add>, %80, %cst_47 [1] : vector<8x8xf32> to vector<8xf32>
    %82 = vector.shape_cast %81 : vector<8xf32> to vector<8x1xf32>
    %83 = vector.broadcast %82 : vector<8x1xf32> to vector<8x8xf32>
    %84 = arith.divf %80, %83 : vector<8x8xf32>
    %cst_48 = arith.constant dense<0.000000e+00> : vector<8x8xf32>
    %85 = tpu.matmul %84, %74, %cst_48 {dimension_numbers = #tpu.dot_dimension_numbers<[1], [0], [0], [1], [0, 0, 1, 1], [], []>} : vector<8x8xf32>, vector<8x8xf32>, vector<8x8xf32> -> vector<8x8xf32>
    %86 = tpu.concatenate %43, %57, %71, %85 in 1 : vector<8x8xf32>, vector<8x8xf32>, vector<8x8xf32>, vector<8x8xf32> -> vector<8x32xf32>
    %cst_49 = arith.constant dense<0.000000e+00> : vector<8x32xf32>
    %87 = tpu.matmul %86, %1, %cst_49 {dimension_numbers = #tpu.dot_dimension_numbers<[1], [0], [0], [1], [0, 0, 1, 1], [], []>} : vector<8x32xf32>, vector<32x32xf32>, vector<8x32xf32> -> vector<8x32xf32>
    %88 = vector.broadcast %7 : vector<1x32xf32> to vector<8x32xf32>
    %89 = arith.addf %87, %88 : vector<8x32xf32>
    %90 = arith.addf %21, %89 : vector<8x32xf32>
    %cst_50 = arith.constant dense<0.000000e+00> : vector<8xf32>
    %91 = vector.multi_reduction <add>, %90, %cst_50 [1] : vector<8x32xf32> to vector<8xf32>
    %92 = vector.shape_cast %91 : vector<8xf32> to vector<8x1xf32>
    %cst_51 = arith.constant 3.200000e+01 : f32
    %93 = vector.broadcast %cst_51 : f32 to vector<8x1xf32>
    %94 = arith.divf %92, %93 : vector<8x1xf32>
    %95 = vector.broadcast %94 : vector<8x1xf32> to vector<8x32xf32>
    %96 = arith.subf %90, %95 : vector<8x32xf32>
    %97 = arith.mulf %96, %96 : vector<8x32xf32>
    %cst_52 = arith.constant dense<0.000000e+00> : vector<8xf32>
    %98 = vector.multi_reduction <add>, %97, %cst_52 [1] : vector<8x32xf32> to vector<8xf32>
    %99 = vector.shape_cast %98 : vector<8xf32> to vector<8x1xf32>
    %cst_53 = arith.constant 3.200000e+01 : f32
    %100 = vector.broadcast %cst_53 : f32 to vector<8x1xf32>
    %101 = arith.divf %99, %100 : vector<8x1xf32>
    %102 = vector.broadcast %94 : vector<8x1xf32> to vector<8x32xf32>
    %103 = arith.subf %90, %102 : vector<8x32xf32>
    %cst_54 = arith.constant 9.99999974E-6 : f32
    %104 = vector.broadcast %cst_54 : f32 to vector<8x1xf32>
    %105 = arith.addf %101, %104 : vector<8x1xf32>
    %106 = math.rsqrt %105 : vector<8x1xf32>
    %107 = vector.broadcast %106 : vector<8x1xf32> to vector<8x32xf32>
    %108 = arith.mulf %103, %107 : vector<8x32xf32>
    %109 = vector.broadcast %13 : vector<1x32xf32> to vector<8x32xf32>
    %110 = arith.mulf %108, %109 : vector<8x32xf32>
    %111 = vector.broadcast %14 : vector<1x32xf32> to vector<8x32xf32>
    %112 = arith.addf %110, %111 : vector<8x32xf32>
    %cst_55 = arith.constant dense<0.000000e+00> : vector<8x32xf32>
    %113 = tpu.matmul %112, %2, %cst_55 {dimension_numbers = #tpu.dot_dimension_numbers<[1], [0], [0], [1], [0, 0, 1, 1], [], []>} : vector<8x32xf32>, vector<32x32xf32>, vector<8x32xf32> -> vector<8x32xf32>
    %114 = vector.broadcast %8 : vector<1x32xf32> to vector<8x32xf32>
    %115 = arith.addf %113, %114 : vector<8x32xf32>
    %cst_56 = arith.constant dense<0.000000e+00> : vector<12x64xf32>
    %116 = tpu.matmul %23, %3, %cst_56 {dimension_numbers = #tpu.dot_dimension_numbers<[1], [0], [0], [1], [0, 0, 1, 1], [], []>} : vector<12x32xf32>, vector<32x64xf32>, vector<12x64xf32> -> vector<12x64xf32>
    %117 = vector.broadcast %9 : vector<1x64xf32> to vector<12x64xf32>
    %118 = arith.addf %116, %117 : vector<12x64xf32>
    %119 = vector.extract_strided_slice %118 {offsets = [0, 0], sizes = [12, 32], strides = [1, 1]} : vector<12x64xf32> to vector<12x32xf32>
    %120 = vector.extract_strided_slice %118 {offsets = [0, 32], sizes = [12, 32], strides = [1, 1]} : vector<12x64xf32> to vector<12x32xf32>
    %121 = vector.extract_strided_slice %115 {offsets = [0, 0], sizes = [8, 8], strides = [1, 1]} : vector<8x32xf32> to vector<8x8xf32>
    %122 = vector.extract_strided_slice %119 {offsets = [0, 0], sizes = [12, 8], strides = [1, 1]} : vector<12x32xf32> to vector<12x8xf32>
    %123 = vector.extract_strided_slice %120 {offsets = [0, 0], sizes = [12, 8], strides = [1, 1]} : vector<12x32xf32> to vector<12x8xf32>
    %cst_57 = arith.constant dense<0.000000e+00> : vector<8x12xf32>
    %124 = tpu.matmul %121, %122, %cst_57 {dimension_numbers = #tpu.dot_dimension_numbers<[1], [1], [0], [0], [0, 0, 1, 0], [], []>} : vector<8x8xf32>, vector<12x8xf32>, vector<8x12xf32> -> vector<8x12xf32>
    %cst_58 = arith.constant dense<0xFF800000> : vector<8xf32>
    %125 = vector.multi_reduction <maximumf>, %124, %cst_58 [1] : vector<8x12xf32> to vector<8xf32>
    %126 = vector.shape_cast %125 : vector<8xf32> to vector<8x1xf32>
    %127 = vector.broadcast %126 : vector<8x1xf32> to vector<8x12xf32>
    %128 = arith.subf %124, %127 : vector<8x12xf32>
    %129 = math.exp %128 : vector<8x12xf32>
    %cst_59 = arith.constant dense<0.000000e+00> : vector<8xf32>
    %130 = vector.multi_reduction <add>, %129, %cst_59 [1] : vector<8x12xf32> to vector<8xf32>
    %131 = vector.shape_cast %130 : vector<8xf32> to vector<8x1xf32>
    %132 = vector.broadcast %131 : vector<8x1xf32> to vector<8x12xf32>
    %133 = arith.divf %129, %132 : vector<8x12xf32>
    %cst_60 = arith.constant dense<0.000000e+00> : vector<8x8xf32>
    %134 = tpu.matmul %133, %123, %cst_60 {dimension_numbers = #tpu.dot_dimension_numbers<[1], [0], [0], [1], [0, 0, 1, 1], [], []>} : vector<8x12xf32>, vector<12x8xf32>, vector<8x8xf32> -> vector<8x8xf32>
    %135 = vector.extract_strided_slice %115 {offsets = [0, 8], sizes = [8, 8], strides = [1, 1]} : vector<8x32xf32> to vector<8x8xf32>
    %136 = vector.extract_strided_slice %119 {offsets = [0, 8], sizes = [12, 8], strides = [1, 1]} : vector<12x32xf32> to vector<12x8xf32>
    %137 = vector.extract_strided_slice %120 {offsets = [0, 8], sizes = [12, 8], strides = [1, 1]} : vector<12x32xf32> to vector<12x8xf32>
    %cst_61 = arith.constant dense<0.000000e+00> : vector<8x12xf32>
    %138 = tpu.matmul %135, %136, %cst_61 {dimension_numbers = #tpu.dot_dimension_numbers<[1], [1], [0], [0], [0, 0, 1, 0], [], []>} : vector<8x8xf32>, vector<12x8xf32>, vector<8x12xf32> -> vector<8x12xf32>
    %cst_62 = arith.constant dense<0xFF800000> : vector<8xf32>
    %139 = vector.multi_reduction <maximumf>, %138, %cst_62 [1] : vector<8x12xf32> to vector<8xf32>
    %140 = vector.shape_cast %139 : vector<8xf32> to vector<8x1xf32>
    %141 = vector.broadcast %140 : vector<8x1xf32> to vector<8x12xf32>
    %142 = arith.subf %138, %141 : vector<8x12xf32>
    %143 = math.exp %142 : vector<8x12xf32>
    %cst_63 = arith.constant dense<0.000000e+00> : vector<8xf32>
    %144 = vector.multi_reduction <add>, %143, %cst_63 [1] : vector<8x12xf32> to vector<8xf32>
    %145 = vector.shape_cast %144 : vector<8xf32> to vector<8x1xf32>
    %146 = vector.broadcast %145 : vector<8x1xf32> to vector<8x12xf32>
    %147 = arith.divf %143, %146 : vector<8x12xf32>
    %cst_64 = arith.constant dense<0.000000e+00> : vector<8x8xf32>
    %148 = tpu.matmul %147, %137, %cst_64 {dimension_numbers = #tpu.dot_dimension_numbers<[1], [0], [0], [1], [0, 0, 1, 1], [], []>} : vector<8x12xf32>, vector<12x8xf32>, vector<8x8xf32> -> vector<8x8xf32>
    %149 = vector.extract_strided_slice %115 {offsets = [0, 16], sizes = [8, 8], strides = [1, 1]} : vector<8x32xf32> to vector<8x8xf32>
    %150 = vector.extract_strided_slice %119 {offsets = [0, 16], sizes = [12, 8], strides = [1, 1]} : vector<12x32xf32> to vector<12x8xf32>
    %151 = vector.extract_strided_slice %120 {offsets = [0, 16], sizes = [12, 8], strides = [1, 1]} : vector<12x32xf32> to vector<12x8xf32>
    %cst_65 = arith.constant dense<0.000000e+00> : vector<8x12xf32>
    %152 = tpu.matmul %149, %150, %cst_65 {dimension_numbers = #tpu.dot_dimension_numbers<[1], [1], [0], [0], [0, 0, 1, 0], [], []>} : vector<8x8xf32>, vector<12x8xf32>, vector<8x12xf32> -> vector<8x12xf32>
    %cst_66 = arith.constant dense<0xFF800000> : vector<8xf32>
    %153 = vector.multi_reduction <maximumf>, %152, %cst_66 [1] : vector<8x12xf32> to vector<8xf32>
    %154 = vector.shape_cast %153 : vector<8xf32> to vector<8x1xf32>
    %155 = vector.broadcast %154 : vector<8x1xf32> to vector<8x12xf32>
    %156 = arith.subf %152, %155 : vector<8x12xf32>
    %157 = math.exp %156 : vector<8x12xf32>
    %cst_67 = arith.constant dense<0.000000e+00> : vector<8xf32>
    %158 = vector.multi_reduction <add>, %157, %cst_67 [1] : vector<8x12xf32> to vector<8xf32>
    %159 = vector.shape_cast %158 : vector<8xf32> to vector<8x1xf32>
    %160 = vector.broadcast %159 : vector<8x1xf32> to vector<8x12xf32>
    %161 = arith.divf %157, %160 : vector<8x12xf32>
    %cst_68 = arith.constant dense<0.000000e+00> : vector<8x8xf32>
    %162 = tpu.matmul %161, %151, %cst_68 {dimension_numbers = #tpu.dot_dimension_numbers<[1], [0], [0], [1], [0, 0, 1, 1], [], []>} : vector<8x12xf32>, vector<12x8xf32>, vector<8x8xf32> -> vector<8x8xf32>
    %163 = vector.extract_strided_slice %115 {offsets = [0, 24], sizes = [8, 8], strides = [1, 1]} : vector<8x32xf32> to vector<8x8xf32>
    %164 = vector.extract_strided_slice %119 {offsets = [0, 24], sizes = [12, 8], strides = [1, 1]} : vector<12x32xf32> to vector<12x8xf32>
    %165 = vector.extract_strided_slice %120 {offsets = [0, 24], sizes = [12, 8], strides = [1, 1]} : vector<12x32xf32> to vector<12x8xf32>
    %cst_69 = arith.constant dense<0.000000e+00> : vector<8x12xf32>
    %166 = tpu.matmul %163, %164, %cst_69 {dimension_numbers = #tpu.dot_dimension_numbers<[1], [1], [0], [0], [0, 0, 1, 0], [], []>} : vector<8x8xf32>, vector<12x8xf32>, vector<8x12xf32> -> vector<8x12xf32>
    %cst_70 = arith.constant dense<0xFF800000> : vector<8xf32>
    %167 = vector.multi_reduction <maximumf>, %166, %cst_70 [1] : vector<8x12xf32> to vector<8xf32>
    %168 = vector.shape_cast %167 : vector<8xf32> to vector<8x1xf32>
    %169 = vector.broadcast %168 : vector<8x1xf32> to vector<8x12xf32>
    %170 = arith.subf %166, %169 : vector<8x12xf32>
    %171 = math.exp %170 : vector<8x12xf32>
    %cst_71 = arith.constant dense<0.000000e+00> : vector<8xf32>
    %172 = vector.multi_reduction <add>, %171, %cst_71 [1] : vector<8x12xf32> to vector<8xf32>
    %173 = vector.shape_cast %172 : vector<8xf32> to vector<8x1xf32>
    %174 = vector.broadcast %173 : vector<8x1xf32> to vector<8x12xf32>
    %175 = arith.divf %171, %174 : vector<8x12xf32>
    %cst_72 = arith.constant dense<0.000000e+00> : vector<8x8xf32>
    %176 = tpu.matmul %175, %165, %cst_72 {dimension_numbers = #tpu.dot_dimension_numbers<[1], [0], [0], [1], [0, 0, 1, 1], [], []>} : vector<8x12xf32>, vector<12x8xf32>, vector<8x8xf32> -> vector<8x8xf32>
    %177 = tpu.concatenate %134, %148, %162, %176 in 1 : vector<8x8xf32>, vector<8x8xf32>, vector<8x8xf32>, vector<8x8xf32> -> vector<8x32xf32>
    %cst_73 = arith.constant dense<0.000000e+00> : vector<8x32xf32>
    %178 = tpu.matmul %177, %4, %cst_73 {dimension_numbers = #tpu.dot_dimension_numbers<[1], [0], [0], [1], [0, 0, 1, 1], [], []>} : vector<8x32xf32>, vector<32x32xf32>, vector<8x32xf32> -> vector<8x32xf32>
    %179 = vector.broadcast %10 : vector<1x32xf32> to vector<8x32xf32>
    %180 = arith.addf %178, %179 : vector<8x32xf32>
    %181 = arith.addf %112, %180 : vector<8x32xf32>
    %cst_74 = arith.constant dense<0.000000e+00> : vector<8xf32>
    %182 = vector.multi_reduction <add>, %181, %cst_74 [1] : vector<8x32xf32> to vector<8xf32>
    %183 = vector.shape_cast %182 : vector<8xf32> to vector<8x1xf32>
    %cst_75 = arith.constant 3.200000e+01 : f32
    %184 = vector.broadcast %cst_75 : f32 to vector<8x1xf32>
    %185 = arith.divf %183, %184 : vector<8x1xf32>
    %186 = vector.broadcast %185 : vector<8x1xf32> to vector<8x32xf32>
    %187 = arith.subf %181, %186 : vector<8x32xf32>
    %188 = arith.mulf %187, %187 : vector<8x32xf32>
    %cst_76 = arith.constant dense<0.000000e+00> : vector<8xf32>
    %189 = vector.multi_reduction <add>, %188, %cst_76 [1] : vector<8x32xf32> to vector<8xf32>
    %190 = vector.shape_cast %189 : vector<8xf32> to vector<8x1xf32>
    %cst_77 = arith.constant 3.200000e+01 : f32
    %191 = vector.broadcast %cst_77 : f32 to vector<8x1xf32>
    %192 = arith.divf %190, %191 : vector<8x1xf32>
    %193 = vector.broadcast %185 : vector<8x1xf32> to vector<8x32xf32>
    %194 = arith.subf %181, %193 : vector<8x32xf32>
    %cst_78 = arith.constant 9.99999974E-6 : f32
    %195 = vector.broadcast %cst_78 : f32 to vector<8x1xf32>
    %196 = arith.addf %192, %195 : vector<8x1xf32>
    %197 = math.rsqrt %196 : vector<8x1xf32>
    %198 = vector.broadcast %197 : vector<8x1xf32> to vector<8x32xf32>
    %199 = arith.mulf %194, %198 : vector<8x32xf32>
    %200 = vector.broadcast %15 : vector<1x32xf32> to vector<8x32xf32>
    %201 = arith.mulf %199, %200 : vector<8x32xf32>
    %202 = vector.broadcast %16 : vector<1x32xf32> to vector<8x32xf32>
    %203 = arith.addf %201, %202 : vector<8x32xf32>
    %cst_79 = arith.constant dense<0.000000e+00> : vector<8x64xf32>
    %204 = tpu.matmul %203, %5, %cst_79 {dimension_numbers = #tpu.dot_dimension_numbers<[1], [0], [0], [1], [0, 0, 1, 1], [], []>} : vector<8x32xf32>, vector<32x64xf32>, vector<8x64xf32> -> vector<8x64xf32>
    %205 = vector.broadcast %11 : vector<1x64xf32> to vector<8x64xf32>
    %206 = arith.addf %204, %205 : vector<8x64xf32>
    %cst_80 = arith.constant 0.000000e+00 : f32
    %207 = vector.broadcast %cst_80 : f32 to vector<8x64xf32>
    %208 = arith.maximumf %206, %207 : vector<8x64xf32>
    %cst_81 = arith.constant dense<0.000000e+00> : vector<8x32xf32>
    %209 = tpu.matmul %208, %19, %cst_81 {dimension_numbers = #tpu.dot_dimension_numbers<[1], [0], [0], [1], [0, 0, 1, 1], [], []>} : vector<8x64xf32>, vector<64x32xf32>, vector<8x32xf32> -> vector<8x32xf32>
    %210 = vector.broadcast %12 : vector<1x32xf32> to vector<8x32xf32>
    %211 = arith.addf %209, %210 : vector<8x32xf32>
    %212 = arith.addf %203, %211 : vector<8x32xf32>
    %cst_82 = arith.constant dense<0.000000e+00> : vector<8xf32>
    %213 = vector.multi_reduction <add>, %212, %cst_82 [1] : vector<8x32xf32> to vector<8xf32>
    %214 = vector.shape_cast %213 : vector<8xf32> to vector<8x1xf32>
    %cst_83 = arith.constant 3.200000e+01 : f32
    %215 = vector.broadcast %cst_83 : f32 to vector<8x1xf32>
    %216 = arith.divf %214, %215 : vector<8x1xf32>
    %217 = vector.broadcast %216 : vector<8x1xf32> to vector<8x32xf32>
    %218 = arith.subf %212, %217 : vector<8x32xf32>
    %219 = arith.mulf %218, %218 : vector<8x32xf32>
    %cst_84 = arith.constant dense<0.000000e+00> : vector<8xf32>
    %220 = vector.multi_reduction <add>, %219, %cst_84 [1] : vector<8x32xf32> to vector<8xf32>
    %221 = vector.shape_cast %220 : vector<8xf32> to vector<8x1xf32>
    %cst_85 = arith.constant 3.200000e+01 : f32
    %222 = vector.broadcast %cst_85 : f32 to vector<8x1xf32>
    %223 = arith.divf %221, %222 : vector<8x1xf32>
    %224 = vector.broadcast %216 : vector<8x1xf32> to vector<8x32xf32>
    %225 = arith.subf %212, %224 : vector<8x32xf32>
    %cst_86 = arith.constant 9.99999974E-6 : f32
    %226 = vector.broadcast %cst_86 : f32 to vector<8x1xf32>
    %227 = arith.addf %223, %226 : vector<8x1xf32>
    %228 = math.rsqrt %227 : vector<8x1xf32>
    %229 = vector.broadcast %228 : vector<8x1xf32> to vector<8x32xf32>
    %230 = arith.mulf %225, %229 : vector<8x32xf32>
    %231 = vector.broadcast %17 : vector<1x32xf32> to vector<8x32xf32>
    %232 = arith.mulf %230, %231 : vector<8x32xf32>
    %233 = vector.broadcast %18 : vector<1x32xf32> to vector<8x32xf32>
    %234 = arith.addf %232, %233 : vector<8x32xf32>
    %c0_87 = arith.constant 0 : index
    %c0_88 = arith.constant 0 : index
    %c0_89 = arith.constant 0 : index
    %235 = vector.load %arg6[%c0_87, %c0_88, %c0_89] : memref<2x8x32xf32, #tpu.memory_space<vmem>>, vector<1x8x32xf32>
    %236 = vector.shape_cast %235 : vector<1x8x32xf32> to vector<8x32xf32>
    %237 = vector.shape_cast %234 : vector<8x32xf32> to vector<1x8x32xf32>
    tpu.vector_store %arg6[%c0_87, %c0_88, %c0_89], %237 {strides = array<i32>} : memref<2x8x32xf32, #tpu.memory_space<vmem>>, vector<1x8x32xf32>,
    %c1 = arith.constant 1 : index
    %c0_90 = arith.constant 0 : index
    %c0_91 = arith.constant 0 : index
    %238 = vector.load %arg1[%c1, %c0_90, %c0_91] : memref<2x8x32xf32, #tpu.memory_space<vmem>>, vector<1x8x32xf32>
    %239 = vector.shape_cast %238 : vector<1x8x32xf32> to vector<8x32xf32>
    %c1_92 = arith.constant 1 : index
    %c0_93 = arith.constant 0 : index
    %c0_94 = arith.constant 0 : index
    %240 = vector.load %arg2[%c1_92, %c0_93, %c0_94] : memref<2x12x32xf32, #tpu.memory_space<vmem>>, vector<1x12x32xf32>
    %241 = vector.shape_cast %240 : vector<1x12x32xf32> to vector<12x32xf32>
    %cst_95 = arith.constant dense<0.000000e+00> : vector<8x96xf32>
    %242 = tpu.matmul %239, %0, %cst_95 {dimension_numbers = #tpu.dot_dimension_numbers<[1], [0], [0], [1], [0, 0, 1, 1], [], []>} : vector<8x32xf32>, vector<32x96xf32>, vector<8x96xf32> -> vector<8x96xf32>
    %243 = vector.broadcast %6 : vector<1x96xf32> to vector<8x96xf32>
    %244 = arith.addf %242, %243 : vector<8x96xf32>
    %245 = vector.extract_strided_slice %244 {offsets = [0, 0], sizes = [8, 32], strides = [1, 1]} : vector<8x96xf32> to vector<8x32xf32>
    %246 = vector.extract_strided_slice %244 {offsets = [0, 32], sizes = [8, 32], strides = [1, 1]} : vector<8x96xf32> to vector<8x32xf32>
    %247 = vector.extract_strided_slice %244 {offsets = [0, 64], sizes = [8, 32], strides = [1, 1]} : vector<8x96xf32> to vector<8x32xf32>
    %248 = vector.extract_strided_slice %245 {offsets = [0, 0], sizes = [8, 8], strides = [1, 1]} : vector<8x32xf32> to vector<8x8xf32>
    %249 = vector.extract_strided_slice %246 {offsets = [0, 0], sizes = [8, 8], strides = [1, 1]} : vector<8x32xf32> to vector<8x8xf32>
    %250 = vector.extract_strided_slice %247 {offsets = [0, 0], sizes = [8, 8], strides = [1, 1]} : vector<8x32xf32> to vector<8x8xf32>
    %cst_96 = arith.constant dense<0.000000e+00> : vector<8x8xf32>
    %251 = tpu.matmul %248, %249, %cst_96 {dimension_numbers = #tpu.dot_dimension_numbers<[1], [1], [0], [0], [0, 0, 1, 0], [], []>} : vector<8x8xf32>, vector<8x8xf32>, vector<8x8xf32> -> vector<8x8xf32>
    %cst_97 = arith.constant dense<0xFF800000> : vector<8xf32>
    %252 = vector.multi_reduction <maximumf>, %251, %cst_97 [1] : vector<8x8xf32> to vector<8xf32>
    %253 = vector.shape_cast %252 : vector<8xf32> to vector<8x1xf32>
    %254 = vector.broadcast %253 : vector<8x1xf32> to vector<8x8xf32>
    %255 = arith.subf %251, %254 : vector<8x8xf32>
    %256 = math.exp %255 : vector<8x8xf32>
    %cst_98 = arith.constant dense<0.000000e+00> : vector<8xf32>
    %257 = vector.multi_reduction <add>, %256, %cst_98 [1] : vector<8x8xf32> to vector<8xf32>
    %258 = vector.shape_cast %257 : vector<8xf32> to vector<8x1xf32>
    %259 = vector.broadcast %258 : vector<8x1xf32> to vector<8x8xf32>
    %260 = arith.divf %256, %259 : vector<8x8xf32>
    %cst_99 = arith.constant dense<0.000000e+00> : vector<8x8xf32>
    %261 = tpu.matmul %260, %250, %cst_99 {dimension_numbers = #tpu.dot_dimension_numbers<[1], [0], [0], [1], [0, 0, 1, 1], [], []>} : vector<8x8xf32>, vector<8x8xf32>, vector<8x8xf32> -> vector<8x8xf32>
    %262 = vector.extract_strided_slice %245 {offsets = [0, 8], sizes = [8, 8], strides = [1, 1]} : vector<8x32xf32> to vector<8x8xf32>
    %263 = vector.extract_strided_slice %246 {offsets = [0, 8], sizes = [8, 8], strides = [1, 1]} : vector<8x32xf32> to vector<8x8xf32>
    %264 = vector.extract_strided_slice %247 {offsets = [0, 8], sizes = [8, 8], strides = [1, 1]} : vector<8x32xf32> to vector<8x8xf32>
    %cst_100 = arith.constant dense<0.000000e+00> : vector<8x8xf32>
    %265 = tpu.matmul %262, %263, %cst_100 {dimension_numbers = #tpu.dot_dimension_numbers<[1], [1], [0], [0], [0, 0, 1, 0], [], []>} : vector<8x8xf32>, vector<8x8xf32>, vector<8x8xf32> -> vector<8x8xf32>
    %cst_101 = arith.constant dense<0xFF800000> : vector<8xf32>
    %266 = vector.multi_reduction <maximumf>, %265, %cst_101 [1] : vector<8x8xf32> to vector<8xf32>
    %267 = vector.shape_cast %266 : vector<8xf32> to vector<8x1xf32>
    %268 = vector.broadcast %267 : vector<8x1xf32> to vector<8x8xf32>
    %269 = arith.subf %265, %268 : vector<8x8xf32>
    %270 = math.exp %269 : vector<8x8xf32>
    %cst_102 = arith.constant dense<0.000000e+00> : vector<8xf32>
    %271 = vector.multi_reduction <add>, %270, %cst_102 [1] : vector<8x8xf32> to vector<8xf32>
    %272 = vector.shape_cast %271 : vector<8xf32> to vector<8x1xf32>
    %273 = vector.broadcast %272 : vector<8x1xf32> to vector<8x8xf32>
    %274 = arith.divf %270, %273 : vector<8x8xf32>
    %cst_103 = arith.constant dense<0.000000e+00> : vector<8x8xf32>
    %275 = tpu.matmul %274, %264, %cst_103 {dimension_numbers = #tpu.dot_dimension_numbers<[1], [0], [0], [1], [0, 0, 1, 1], [], []>} : vector<8x8xf32>, vector<8x8xf32>, vector<8x8xf32> -> vector<8x8xf32>
    %276 = vector.extract_strided_slice %245 {offsets = [0, 16], sizes = [8, 8], strides = [1, 1]} : vector<8x32xf32> to vector<8x8xf32>
    %277 = vector.extract_strided_slice %246 {offsets = [0, 16], sizes = [8, 8], strides = [1, 1]} : vector<8x32xf32> to vector<8x8xf32>
    %278 = vector.extract_strided_slice %247 {offsets = [0, 16], sizes = [8, 8], strides = [1, 1]} : vector<8x32xf32> to vector<8x8xf32>
    %cst_104 = arith.constant dense<0.000000e+00> : vector<8x8xf32>
    %279 = tpu.matmul %276, %277, %cst_104 {dimension_numbers = #tpu.dot_dimension_numbers<[1], [1], [0], [0], [0, 0, 1, 0], [], []>} : vector<8x8xf32>, vector<8x8xf32>, vector<8x8xf32> -> vector<8x8xf32>
    %cst_105 = arith.constant dense<0xFF800000> : vector<8xf32>
    %280 = vector.multi_reduction <maximumf>, %279, %cst_105 [1] : vector<8x8xf32> to vector<8xf32>
    %281 = vector.shape_cast %280 : vector<8xf32> to vector<8x1xf32>
    %282 = vector.broadcast %281 : vector<8x1xf32> to vector<8x8xf32>
    %283 = arith.subf %279, %282 : vector<8x8xf32>
    %284 = math.exp %283 : vector<8x8xf32>
    %cst_106 = arith.constant dense<0.000000e+00> : vector<8xf32>
    %285 = vector.multi_reduction <add>, %284, %cst_106 [1] : vector<8x8xf32> to vector<8xf32>
    %286 = vector.shape_cast %285 : vector<8xf32> to vector<8x1xf32>
    %287 = vector.broadcast %286 : vector<8x1xf32> to vector<8x8xf32>
    %288 = arith.divf %284, %287 : vector<8x8xf32>
    %cst_107 = arith.constant dense<0.000000e+00> : vector<8x8xf32>
    %289 = tpu.matmul %288, %278, %cst_107 {dimension_numbers = #tpu.dot_dimension_numbers<[1], [0], [0], [1], [0, 0, 1, 1], [], []>} : vector<8x8xf32>, vector<8x8xf32>, vector<8x8xf32> -> vector<8x8xf32>
    %290 = vector.extract_strided_slice %245 {offsets = [0, 24], sizes = [8, 8], strides = [1, 1]} : vector<8x32xf32> to vector<8x8xf32>
    %291 = vector.extract_strided_slice %246 {offsets = [0, 24], sizes = [8, 8], strides = [1, 1]} : vector<8x32xf32> to vector<8x8xf32>
    %292 = vector.extract_strided_slice %247 {offsets = [0, 24], sizes = [8, 8], strides = [1, 1]} : vector<8x32xf32> to vector<8x8xf32>
    %cst_108 = arith.constant dense<0.000000e+00> : vector<8x8xf32>
    %293 = tpu.matmul %290, %291, %cst_108 {dimension_numbers = #tpu.dot_dimension_numbers<[1], [1], [0], [0], [0, 0, 1, 0], [], []>} : vector<8x8xf32>, vector<8x8xf32>, vector<8x8xf32> -> vector<8x8xf32>
    %cst_109 = arith.constant dense<0xFF800000> : vector<8xf32>
    %294 = vector.multi_reduction <maximumf>, %293, %cst_109 [1] : vector<8x8xf32> to vector<8xf32>
    %295 = vector.shape_cast %294 : vector<8xf32> to vector<8x1xf32>
    %296 = vector.broadcast %295 : vector<8x1xf32> to vector<8x8xf32>
    %297 = arith.subf %293, %296 : vector<8x8xf32>
    %298 = math.exp %297 : vector<8x8xf32>
    %cst_110 = arith.constant dense<0.000000e+00> : vector<8xf32>
    %299 = vector.multi_reduction <add>, %298, %cst_110 [1] : vector<8x8xf32> to vector<8xf32>
    %300 = vector.shape_cast %299 : vector<8xf32> to vector<8x1xf32>
    %301 = vector.broadcast %300 : vector<8x1xf32> to vector<8x8xf32>
    %302 = arith.divf %298, %301 : vector<8x8xf32>
    %cst_111 = arith.constant dense<0.000000e+00> : vector<8x8xf32>
    %303 = tpu.matmul %302, %292, %cst_111 {dimension_numbers = #tpu.dot_dimension_numbers<[1], [0], [0], [1], [0, 0, 1, 1], [], []>} : vector<8x8xf32>, vector<8x8xf32>, vector<8x8xf32> -> vector<8x8xf32>
    %304 = tpu.concatenate %261, %275, %289, %303 in 1 : vector<8x8xf32>, vector<8x8xf32>, vector<8x8xf32>, vector<8x8xf32> -> vector<8x32xf32>
    %cst_112 = arith.constant dense<0.000000e+00> : vector<8x32xf32>
    %305 = tpu.matmul %304, %1, %cst_112 {dimension_numbers = #tpu.dot_dimension_numbers<[1], [0], [0], [1], [0, 0, 1, 1], [], []>} : vector<8x32xf32>, vector<32x32xf32>, vector<8x32xf32> -> vector<8x32xf32>
    %306 = vector.broadcast %7 : vector<1x32xf32> to vector<8x32xf32>
    %307 = arith.addf %305, %306 : vector<8x32xf32>
    %308 = arith.addf %239, %307 : vector<8x32xf32>
    %cst_113 = arith.constant dense<0.000000e+00> : vector<8xf32>
    %309 = vector.multi_reduction <add>, %308, %cst_113 [1] : vector<8x32xf32> to vector<8xf32>
    %310 = vector.shape_cast %309 : vector<8xf32> to vector<8x1xf32>
    %cst_114 = arith.constant 3.200000e+01 : f32
    %311 = vector.broadcast %cst_114 : f32 to vector<8x1xf32>
    %312 = arith.divf %310, %311 : vector<8x1xf32>
    %313 = vector.broadcast %312 : vector<8x1xf32> to vector<8x32xf32>
    %314 = arith.subf %308, %313 : vector<8x32xf32>
    %315 = arith.mulf %314, %314 : vector<8x32xf32>
    %cst_115 = arith.constant dense<0.000000e+00> : vector<8xf32>
    %316 = vector.multi_reduction <add>, %315, %cst_115 [1] : vector<8x32xf32> to vector<8xf32>
    %317 = vector.shape_cast %316 : vector<8xf32> to vector<8x1xf32>
    %cst_116 = arith.constant 3.200000e+01 : f32
    %318 = vector.broadcast %cst_116 : f32 to vector<8x1xf32>
    %319 = arith.divf %317, %318 : vector<8x1xf32>
    %320 = vector.broadcast %312 : vector<8x1xf32> to vector<8x32xf32>
    %321 = arith.subf %308, %320 : vector<8x32xf32>
    %cst_117 = arith.constant 9.99999974E-6 : f32
    %322 = vector.broadcast %cst_117 : f32 to vector<8x1xf32>
    %323 = arith.addf %319, %322 : vector<8x1xf32>
    %324 = math.rsqrt %323 : vector<8x1xf32>
    %325 = vector.broadcast %324 : vector<8x1xf32> to vector<8x32xf32>
    %326 = arith.mulf %321, %325 : vector<8x32xf32>
    %327 = vector.broadcast %13 : vector<1x32xf32> to vector<8x32xf32>
    %328 = arith.mulf %326, %327 : vector<8x32xf32>
    %329 = vector.broadcast %14 : vector<1x32xf32> to vector<8x32xf32>
    %330 = arith.addf %328, %329 : vector<8x32xf32>
    %cst_118 = arith.constant dense<0.000000e+00> : vector<8x32xf32>
    %331 = tpu.matmul %330, %2, %cst_118 {dimension_numbers = #tpu.dot_dimension_numbers<[1], [0], [0], [1], [0, 0, 1, 1], [], []>} : vector<8x32xf32>, vector<32x32xf32>, vector<8x32xf32> -> vector<8x32xf32>
    %332 = vector.broadcast %8 : vector<1x32xf32> to vector<8x32xf32>
    %333 = arith.addf %331, %332 : vector<8x32xf32>
    %cst_119 = arith.constant dense<0.000000e+00> : vector<12x64xf32>
    %334 = tpu.matmul %241, %3, %cst_119 {dimension_numbers = #tpu.dot_dimension_numbers<[1], [0], [0], [1], [0, 0, 1, 1], [], []>} : vector<12x32xf32>, vector<32x64xf32>, vector<12x64xf32> -> vector<12x64xf32>
    %335 = vector.broadcast %9 : vector<1x64xf32> to vector<12x64xf32>
    %336 = arith.addf %334, %335 : vector<12x64xf32>
    %337 = vector.extract_strided_slice %336 {offsets = [0, 0], sizes = [12, 32], strides = [1, 1]} : vector<12x64xf32> to vector<12x32xf32>
    %338 = vector.extract_strided_slice %336 {offsets = [0, 32], sizes = [12, 32], strides = [1, 1]} : vector<12x64xf32> to vector<12x32xf32>
    %339 = vector.extract_strided_slice %333 {offsets = [0, 0], sizes = [8, 8], strides = [1, 1]} : vector<8x32xf32> to vector<8x8xf32>
    %340 = vector.extract_strided_slice %337 {offsets = [0, 0], sizes = [12, 8], strides = [1, 1]} : vector<12x32xf32> to vector<12x8xf32>
    %341 = vector.extract_strided_slice %338 {offsets = [0, 0], sizes = [12, 8], strides = [1, 1]} : vector<12x32xf32> to vector<12x8xf32>
    %cst_120 = arith.constant dense<0.000000e+00> : vector<8x12xf32>
    %342 = tpu.matmul %339, %340, %cst_120 {dimension_numbers = #tpu.dot_dimension_numbers<[1], [1], [0], [0], [0, 0, 1, 0], [], []>} : vector<8x8xf32>, vector<12x8xf32>, vector<8x12xf32> -> vector<8x12xf32>
    %cst_121 = arith.constant dense<0xFF800000> : vector<8xf32>
    %343 = vector.multi_reduction <maximumf>, %342, %cst_121 [1] : vector<8x12xf32> to vector<8xf32>
    %344 = vector.shape_cast %343 : vector<8xf32> to vector<8x1xf32>
    %345 = vector.broadcast %344 : vector<8x1xf32> to vector<8x12xf32>
    %346 = arith.subf %342, %345 : vector<8x12xf32>
    %347 = math.exp %346 : vector<8x12xf32>
    %cst_122 = arith.constant dense<0.000000e+00> : vector<8xf32>
    %348 = vector.multi_reduction <add>, %347, %cst_122 [1] : vector<8x12xf32> to vector<8xf32>
    %349 = vector.shape_cast %348 : vector<8xf32> to vector<8x1xf32>
    %350 = vector.broadcast %349 : vector<8x1xf32> to vector<8x12xf32>
    %351 = arith.divf %347, %350 : vector<8x12xf32>
    %cst_123 = arith.constant dense<0.000000e+00> : vector<8x8xf32>
    %352 = tpu.matmul %351, %341, %cst_123 {dimension_numbers = #tpu.dot_dimension_numbers<[1], [0], [0], [1], [0, 0, 1, 1], [], []>} : vector<8x12xf32>, vector<12x8xf32>, vector<8x8xf32> -> vector<8x8xf32>
    %353 = vector.extract_strided_slice %333 {offsets = [0, 8], sizes = [8, 8], strides = [1, 1]} : vector<8x32xf32> to vector<8x8xf32>
    %354 = vector.extract_strided_slice %337 {offsets = [0, 8], sizes = [12, 8], strides = [1, 1]} : vector<12x32xf32> to vector<12x8xf32>
    %355 = vector.extract_strided_slice %338 {offsets = [0, 8], sizes = [12, 8], strides = [1, 1]} : vector<12x32xf32> to vector<12x8xf32>
    %cst_124 = arith.constant dense<0.000000e+00> : vector<8x12xf32>
    %356 = tpu.matmul %353, %354, %cst_124 {dimension_numbers = #tpu.dot_dimension_numbers<[1], [1], [0], [0], [0, 0, 1, 0], [], []>} : vector<8x8xf32>, vector<12x8xf32>, vector<8x12xf32> -> vector<8x12xf32>
    %cst_125 = arith.constant dense<0xFF800000> : vector<8xf32>
    %357 = vector.multi_reduction <maximumf>, %356, %cst_125 [1] : vector<8x12xf32> to vector<8xf32>
    %358 = vector.shape_cast %357 : vector<8xf32> to vector<8x1xf32>
    %359 = vector.broadcast %358 : vector<8x1xf32> to vector<8x12xf32>
    %360 = arith.subf %356, %359 : vector<8x12xf32>
    %361 = math.exp %360 : vector<8x12xf32>
    %cst_126 = arith.constant dense<0.000000e+00> : vector<8xf32>
    %362 = vector.multi_reduction <add>, %361, %cst_126 [1] : vector<8x12xf32> to vector<8xf32>
    %363 = vector.shape_cast %362 : vector<8xf32> to vector<8x1xf32>
    %364 = vector.broadcast %363 : vector<8x1xf32> to vector<8x12xf32>
    %365 = arith.divf %361, %364 : vector<8x12xf32>
    %cst_127 = arith.constant dense<0.000000e+00> : vector<8x8xf32>
    %366 = tpu.matmul %365, %355, %cst_127 {dimension_numbers = #tpu.dot_dimension_numbers<[1], [0], [0], [1], [0, 0, 1, 1], [], []>} : vector<8x12xf32>, vector<12x8xf32>, vector<8x8xf32> -> vector<8x8xf32>
    %367 = vector.extract_strided_slice %333 {offsets = [0, 16], sizes = [8, 8], strides = [1, 1]} : vector<8x32xf32> to vector<8x8xf32>
    %368 = vector.extract_strided_slice %337 {offsets = [0, 16], sizes = [12, 8], strides = [1, 1]} : vector<12x32xf32> to vector<12x8xf32>
    %369 = vector.extract_strided_slice %338 {offsets = [0, 16], sizes = [12, 8], strides = [1, 1]} : vector<12x32xf32> to vector<12x8xf32>
    %cst_128 = arith.constant dense<0.000000e+00> : vector<8x12xf32>
    %370 = tpu.matmul %367, %368, %cst_128 {dimension_numbers = #tpu.dot_dimension_numbers<[1], [1], [0], [0], [0, 0, 1, 0], [], []>} : vector<8x8xf32>, vector<12x8xf32>, vector<8x12xf32> -> vector<8x12xf32>
    %cst_129 = arith.constant dense<0xFF800000> : vector<8xf32>
    %371 = vector.multi_reduction <maximumf>, %370, %cst_129 [1] : vector<8x12xf32> to vector<8xf32>
    %372 = vector.shape_cast %371 : vector<8xf32> to vector<8x1xf32>
    %373 = vector.broadcast %372 : vector<8x1xf32> to vector<8x12xf32>
    %374 = arith.subf %370, %373 : vector<8x12xf32>
    %375 = math.exp %374 : vector<8x12xf32>
    %cst_130 = arith.constant dense<0.000000e+00> : vector<8xf32>
    %376 = vector.multi_reduction <add>, %375, %cst_130 [1] : vector<8x12xf32> to vector<8xf32>
    %377 = vector.shape_cast %376 : vector<8xf32> to vector<8x1xf32>
    %378 = vector.broadcast %377 : vector<8x1xf32> to vector<8x12xf32>
    %379 = arith.divf %375, %378 : vector<8x12xf32>
    %cst_131 = arith.constant dense<0.000000e+00> : vector<8x8xf32>
    %380 = tpu.matmul %379, %369, %cst_131 {dimension_numbers = #tpu.dot_dimension_numbers<[1], [0], [0], [1], [0, 0, 1, 1], [], []>} : vector<8x12xf32>, vector<12x8xf32>, vector<8x8xf32> -> vector<8x8xf32>
    %381 = vector.extract_strided_slice %333 {offsets = [0, 24], sizes = [8, 8], strides = [1, 1]} : vector<8x32xf32> to vector<8x8xf32>
    %382 = vector.extract_strided_slice %337 {offsets = [0, 24], sizes = [12, 8], strides = [1, 1]} : vector<12x32xf32> to vector<12x8xf32>
    %383 = vector.extract_strided_slice %338 {offsets = [0, 24], sizes = [12, 8], strides = [1, 1]} : vector<12x32xf32> to vector<12x8xf32>
    %cst_132 = arith.constant dense<0.000000e+00> : vector<8x12xf32>
    %384 = tpu.matmul %381, %382, %cst_132 {dimension_numbers = #tpu.dot_dimension_numbers<[1], [1], [0], [0], [0, 0, 1, 0], [], []>} : vector<8x8xf32>, vector<12x8xf32>, vector<8x12xf32> -> vector<8x12xf32>
    %cst_133 = arith.constant dense<0xFF800000> : vector<8xf32>
    %385 = vector.multi_reduction <maximumf>, %384, %cst_133 [1] : vector<8x12xf32> to vector<8xf32>
    %386 = vector.shape_cast %385 : vector<8xf32> to vector<8x1xf32>
    %387 = vector.broadcast %386 : vector<8x1xf32> to vector<8x12xf32>
    %388 = arith.subf %384, %387 : vector<8x12xf32>
    %389 = math.exp %388 : vector<8x12xf32>
    %cst_134 = arith.constant dense<0.000000e+00> : vector<8xf32>
    %390 = vector.multi_reduction <add>, %389, %cst_134 [1] : vector<8x12xf32> to vector<8xf32>
    %391 = vector.shape_cast %390 : vector<8xf32> to vector<8x1xf32>
    %392 = vector.broadcast %391 : vector<8x1xf32> to vector<8x12xf32>
    %393 = arith.divf %389, %392 : vector<8x12xf32>
    %cst_135 = arith.constant dense<0.000000e+00> : vector<8x8xf32>
    %394 = tpu.matmul %393, %383, %cst_135 {dimension_numbers = #tpu.dot_dimension_numbers<[1], [0], [0], [1], [0, 0, 1, 1], [], []>} : vector<8x12xf32>, vector<12x8xf32>, vector<8x8xf32> -> vector<8x8xf32>
    %395 = tpu.concatenate %352, %366, %380, %394 in 1 : vector<8x8xf32>, vector<8x8xf32>, vector<8x8xf32>, vector<8x8xf32> -> vector<8x32xf32>
    %cst_136 = arith.constant dense<0.000000e+00> : vector<8x32xf32>
    %396 = tpu.matmul %395, %4, %cst_136 {dimension_numbers = #tpu.dot_dimension_numbers<[1], [0], [0], [1], [0, 0, 1, 1], [], []>} : vector<8x32xf32>, vector<32x32xf32>, vector<8x32xf32> -> vector<8x32xf32>
    %397 = vector.broadcast %10 : vector<1x32xf32> to vector<8x32xf32>
    %398 = arith.addf %396, %397 : vector<8x32xf32>
    %399 = arith.addf %330, %398 : vector<8x32xf32>
    %cst_137 = arith.constant dense<0.000000e+00> : vector<8xf32>
    %400 = vector.multi_reduction <add>, %399, %cst_137 [1] : vector<8x32xf32> to vector<8xf32>
    %401 = vector.shape_cast %400 : vector<8xf32> to vector<8x1xf32>
    %cst_138 = arith.constant 3.200000e+01 : f32
    %402 = vector.broadcast %cst_138 : f32 to vector<8x1xf32>
    %403 = arith.divf %401, %402 : vector<8x1xf32>
    %404 = vector.broadcast %403 : vector<8x1xf32> to vector<8x32xf32>
    %405 = arith.subf %399, %404 : vector<8x32xf32>
    %406 = arith.mulf %405, %405 : vector<8x32xf32>
    %cst_139 = arith.constant dense<0.000000e+00> : vector<8xf32>
    %407 = vector.multi_reduction <add>, %406, %cst_139 [1] : vector<8x32xf32> to vector<8xf32>
    %408 = vector.shape_cast %407 : vector<8xf32> to vector<8x1xf32>
    %cst_140 = arith.constant 3.200000e+01 : f32
    %409 = vector.broadcast %cst_140 : f32 to vector<8x1xf32>
    %410 = arith.divf %408, %409 : vector<8x1xf32>
    %411 = vector.broadcast %403 : vector<8x1xf32> to vector<8x32xf32>
    %412 = arith.subf %399, %411 : vector<8x32xf32>
    %cst_141 = arith.constant 9.99999974E-6 : f32
    %413 = vector.broadcast %cst_141 : f32 to vector<8x1xf32>
    %414 = arith.addf %410, %413 : vector<8x1xf32>
    %415 = math.rsqrt %414 : vector<8x1xf32>
    %416 = vector.broadcast %415 : vector<8x1xf32> to vector<8x32xf32>
    %417 = arith.mulf %412, %416 : vector<8x32xf32>
    %418 = vector.broadcast %15 : vector<1x32xf32> to vector<8x32xf32>
    %419 = arith.mulf %417, %418 : vector<8x32xf32>
    %420 = vector.broadcast %16 : vector<1x32xf32> to vector<8x32xf32>
    %421 = arith.addf %419, %420 : vector<8x32xf32>
    %cst_142 = arith.constant dense<0.000000e+00> : vector<8x64xf32>
    %422 = tpu.matmul %421, %5, %cst_142 {dimension_numbers = #tpu.dot_dimension_numbers<[1], [0], [0], [1], [0, 0, 1, 1], [], []>} : vector<8x32xf32>, vector<32x64xf32>, vector<8x64xf32> -> vector<8x64xf32>
    %423 = vector.broadcast %11 : vector<1x64xf32> to vector<8x64xf32>
    %424 = arith.addf %422, %423 : vector<8x64xf32>
    %cst_143 = arith.constant 0.000000e+00 : f32
    %425 = vector.broadcast %cst_143 : f32 to vector<8x64xf32>
    %426 = arith.maximumf %424, %425 : vector<8x64xf32>
    %cst_144 = arith.constant dense<0.000000e+00> : vector<8x32xf32>
    %427 = tpu.matmul %426, %19, %cst_144 {dimension_numbers = #tpu.dot_dimension_numbers<[1], [0], [0], [1], [0, 0, 1, 1], [], []>} : vector<8x64xf32>, vector<64x32xf32>, vector<8x32xf32> -> vector<8x32xf32>
    %428 = vector.broadcast %12 : vector<1x32xf32> to vector<8x32xf32>
    %429 = arith.addf %427, %428 : vector<8x32xf32>
    %430 = arith.addf %421, %429 : vector<8x32xf32>
    %cst_145 = arith.constant dense<0.000000e+00> : vector<8xf32>
    %431 = vector.multi_reduction <add>, %430, %cst_145 [1] : vector<8x32xf32> to vector<8xf32>
    %432 = vector.shape_cast %431 : vector<8xf32> to vector<8x1xf32>
    %cst_146 = arith.constant 3.200000e+01 : f32
    %433 = vector.broadcast %cst_146 : f32 to vector<8x1xf32>
    %434 = arith.divf %432, %433 : vector<8x1xf32>
    %435 = vector.broadcast %434 : vector<8x1xf32> to vector<8x32xf32>
    %436 = arith.subf %430, %435 : vector<8x32xf32>
    %437 = arith.mulf %436, %436 : vector<8x32xf32>
    %cst_147 = arith.constant dense<0.000000e+00> : vector<8xf32>
    %438 = vector.multi_reduction <add>, %437, %cst_147 [1] : vector<8x32xf32> to vector<8xf32>
    %439 = vector.shape_cast %438 : vector<8xf32> to vector<8x1xf32>
    %cst_148 = arith.constant 3.200000e+01 : f32
    %440 = vector.broadcast %cst_148 : f32 to vector<8x1xf32>
    %441 = arith.divf %439, %440 : vector<8x1xf32>
    %442 = vector.broadcast %434 : vector<8x1xf32> to vector<8x32xf32>
    %443 = arith.subf %430, %442 : vector<8x32xf32>
    %cst_149 = arith.constant 9.99999974E-6 : f32
    %444 = vector.broadcast %cst_149 : f32 to vector<8x1xf32>
    %445 = arith.addf %441, %444 : vector<8x1xf32>
    %446 = math.rsqrt %445 : vector<8x1xf32>
    %447 = vector.broadcast %446 : vector<8x1xf32> to vector<8x32xf32>
    %448 = arith.mulf %443, %447 : vector<8x32xf32>
    %449 = vector.broadcast %17 : vector<1x32xf32> to vector<8x32xf32>
    %450 = arith.mulf %448, %449 : vector<8x32xf32>
    %451 = vector.broadcast %18 : vector<1x32xf32> to vector<8x32xf32>
    %452 = arith.addf %450, %451 : vector<8x32xf32>
    %c1_150 = arith.constant 1 : index
    %c0_151 = arith.constant 0 : index
    %c0_152 = arith.constant 0 : index
    %453 = vector.load %arg6[%c1_150, %c0_151, %c0_152] : memref<2x8x32xf32, #tpu.memory_space<vmem>>, vector<1x8x32xf32>
    %454 = vector.shape_cast %453 : vector<1x8x32xf32> to vector<8x32xf32>
    %455 = vector.shape_cast %452 : vector<8x32xf32> to vector<1x8x32xf32>
    tpu.vector_store %arg6[%c1_150, %c0_151, %c0_152], %455 {strides = array<i32>} : memref<2x8x32xf32, #tpu.memory_space<vmem>>, vector<1x8x32xf32>,
    return
  }
  func.func @transform_0(%arg0: i32) -> (i32, i32, i32) {
    %c0_i32 = arith.constant 0 : i32
    %c0_i32_0 = arith.constant 0 : i32
    %c0_i32_1 = arith.constant 0 : i32
    %c0_i32_2 = arith.constant 0 : i32
    return %c0_i32, %c0_i32_0, %c0_i32_1 : i32, i32, i32
  }
  func.func @transform_1(%arg0: i32) -> (i32, i32, i32) {
    %c0_i32 = arith.constant 0 : i32
    %c0_i32_0 = arith.constant 0 : i32
    %c0_i32_1 = arith.constant 0 : i32
    %c0_i32_2 = arith.constant 0 : i32
    return %c0_i32, %c0_i32_0, %c0_i32_1 : i32, i32, i32
  }
  func.func @transform_2(%arg0: i32) -> (i32, i32) {
    %c0_i32 = arith.constant 0 : i32
    %c0_i32_0 = arith.constant 0 : i32
    %c0_i32_1 = arith.constant 0 : i32
    return %c0_i32, %c0_i32_0 : i32, i32
  }
  func.func @transform_3(%arg0: i32) -> (i32, i32) {
    %c0_i32 = arith.constant 0 : i32
    %c0_i32_0 = arith.constant 0 : i32
    %c0_i32_1 = arith.constant 0 : i32
    return %c0_i32, %c0_i32_0 : i32, i32
  }
  func.func @transform_4(%arg0: i32) -> (i32, i32) {
    %c0_i32 = arith.constant 0 : i32
    %c0_i32_0 = arith.constant 0 : i32
    %c0_i32_1 = arith.constant 0 : i32
    return %c0_i32, %c0_i32_0 : i32, i32
  }
  func.func @transform_5(%arg0: i32) -> (i32, i32, i32) {
    %c0_i32 = arith.constant 0 : i32
    %c0_i32_0 = arith.constant 0 : i32
    %c0_i32_1 = arith.constant 0 : i32
    %c0_i32_2 = arith.constant 0 : i32
    return %c0_i32, %c0_i32_0, %c0_i32_1 : i32, i32, i32
  }
}

</mosaic_0001>

<llo_original>
// kernel: _lambda_.1
$region0: #{_lambda_.1}
  #allocation0 [shape = 'u32[]', space=smem, size = 0x4, offset = 0x4, fixed_abs, tag = 'smem constant byte address 0x4 - core index']
  #allocation1 [shape = 'u32[72,128]{1,0:T(1,128)}', space=vmem, size = 0x9000, scoped, tag = 'internal scratch']
  %s0 = inlined_call_operand.vmem [shape: f32[2,8,32], index: 0, kind: input, shape index: {}]
  %s1 = inlined_call_operand.vmem [shape: f32[2,12,32], index: 1, kind: input, shape index: {}]
  %s2 = inlined_call_operand.vmem [shape: f32[32,320], index: 2, kind: input, shape index: {}]
  %s3 = inlined_call_operand.vmem [shape: f32[64,32], index: 3, kind: input, shape index: {}]
  %s4 = inlined_call_operand.vmem [shape: f32[1,544], index: 4, kind: input, shape index: {}]
  %s5 = inlined_call_operand.hbm [shape: f32[2,8,32], index: 5, kind: output, shape index: {}]
  %s6 = sld [smem:[#allocation0]]
  $region30: #{_lambda_.1} parent=0
    _
  %s8 = ssub.s32 1, %s6
  %s9 = scalar_select 0, %s8, %s6
  $region1: #{_lambda_.1} parent=0
    #allocation2 [shape = 'u8[8192]{0}', space=vmem, size = 0x2000, scoped, tag = 'output window, operand 0, single buffered']
    #allocation3 [shape = 's32[1]{0}', space=sflag, size = 0x4, scoped, tag = 'scoped memory for _lambda_.1']
    %10 = vsyncpa [#allocation3], 0
    // Predicated region
    $region2: #{_lambda_.1} parent=1 // pred_check
      _
    $region3: #{_lambda_.1} parent=1 // pred_check_branch
      %12 = sbr.rel (0) target = $region5
    $region4: #{_lambda_.1} parent=1 // pred_region
      _
    $region5: #{_lambda_.1} parent=1 // pred_fallthru
      _
    // Predicated region
    $region6: #{_lambda_.1} parent=1 // pred_check
      _
    $region7: #{_lambda_.1} parent=1 // pred_check_branch
      %14 = sbr.rel (0) target = $region9
    $region8: #{_lambda_.1} parent=1 // pred_region
      _
    $region9: #{_lambda_.1} parent=1 // pred_fallthru
      _
    // Predicated region
    $region10: #{_lambda_.1} parent=1 // pred_check
      _
    $region11: #{_lambda_.1} parent=1 // pred_check_branch
      %16 = sbr.rel (0) target = $region13
    $region12: #{_lambda_.1} parent=1 // pred_region
      _
    $region13: #{_lambda_.1} parent=1 // pred_fallthru
      _
    // Predicated region
    $region14: #{_lambda_.1} parent=1 // pred_check
      _
    $region15: #{_lambda_.1} parent=1 // pred_check_branch
      %18 = sbr.rel (0) target = $region17
    $region16: #{_lambda_.1} parent=1 // pred_region
      _
    $region17: #{_lambda_.1} parent=1 // pred_fallthru
      _
    // Predicated region
    $region18: #{_lambda_.1} parent=1 // pred_check
      _
    $region19: #{_lambda_.1} parent=1 // pred_check_branch
      %20 = sbr.rel (0) target = $region21
    $region20: #{_lambda_.1} parent=1 // pred_region
      _
    $region21: #{_lambda_.1} parent=1 // pred_fallthru
      _
    %v21 = vld [vmem:[%s2] sm:$0xff]
    %v22 = vld [vmem:[%s2 + $0x18] sm:$0xff]
    %v23 = vld [vmem:[%s2 + $0x30] sm:$0xff]
    %v24 = vld [vmem:[%s2 + $0x48] sm:$0xff]
    %v25 = vld [vmem:[%s2 + $0x8] sm:$0xff]
    %v26 = vld [vmem:[%s2 + $0x20] sm:$0xff]
    %v27 = vld [vmem:[%s2 + $0x38] sm:$0xff]
    %v28 = vld [vmem:[%s2 + $0x50] sm:$0xff]
    %v29 = vld [vmem:[%s2 + $0x10] sm:$0xff]
    %v30 = vld [vmem:[%s2 + $0x28] sm:$0xff]
    %v31 = vld [vmem:[%s2 + $0x40] sm:$0xff]
    %v32 = vld [vmem:[%s2 + $0x58] sm:$0xff]
    %v33 = vld [vmem:[%s4] sm:$0x1]
    %v34 = vld [vmem:[%s4 + $0x1] sm:$0x1]
    %v35 = vld [vmem:[%s4 + $0x2] sm:$0x1]
    %v36 = vld [vmem:[%s4 + $0x3] sm:$0x1]
    %v37 = vld [vmem:[%s4 + $0x4] sm:$0x1]
    %v38 = vld [vmem:[%s3] sm:$0xff]
    %v39 = vld [vmem:[%s3 + $0x8] sm:$0xff]
    %v40 = vld [vmem:[%s3 + $0x10] sm:$0xff]
    %v41 = vld [vmem:[%s3 + $0x18] sm:$0xff]
    %v42 = vld [vmem:[%s3 + $0x20] sm:$0xff]
    %v43 = vld [vmem:[%s3 + $0x28] sm:$0xff]
    %v44 = vld [vmem:[%s3 + $0x30] sm:$0xff]
    %v45 = vld [vmem:[%s3 + $0x38] sm:$0xff]
    %v46 = vld [vmem:[%s0] sm:$0xff]
    %v47 = vld [vmem:[%s1] sm:$0xff]
    %v48 = vld [vmem:[%s1 + $0x8] sm:$0xf]
    %v50 = vperm.slane %v33, 0
    %vm52 = vcmask 261120
    %v54 = vsel %vm52, %v46, 0
    %56 = vmatpush.msra.mxu0 0.0
    %57 = vmatpush.msra.mxu0 0.0
    %58 = vmatpush.msra.mxu0 0.0
    %59 = vmatpush.msra.mxu0 0.0
    %60 = vmatpush.msra.mxu0 0.0
    %61 = vmatpush.msra.mxu0 0.0
    %62 = vmatpush.msra.mxu0 0.0
    %63 = vmatpush.msra.mxu0 0.0
    %64 = vmatpush.msra.mxu0 0.0
    %65 = vmatpush.msra.mxu0 0.0
    %66 = vmatpush.msra.mxu0 0.0
    %67 = vmatpush.msra.mxu0 0.0
    %68 = vmatpush.msra.mxu0 %v24
    %69 = vmatpush.msra.mxu0 %v23
    %70 = vmatpush.msra.mxu0 %v22
    %71 = vmatpush.msra.mxu0 %v21
    %72 = vmatmul.f32.gmra.mxu0 %v54
    %v73 = vpop.f32.mrf.mxu0
    %v74 = vadd.f32 %v50, %v73
    %75 = vdwg.mxu0
    %77 = vrot.lane.b32.xlu0 %v74, 96
    %v78 = vpop.permute.xlu0 %77
    %vm79 = vcmask 64512
    %v80 = vsel %vm79, %v74, 0
    %v82 = vsel %vm79, %v78, 0
    %84 = vmatpush.xpose.msra.mxu0 0.0
    %85 = vmatpush.xpose.msra.mxu0 0.0
    %86 = vmatpush.xpose.msra.mxu0 0.0
    %87 = vmatpush.xpose.msra.mxu0 0.0
    %88 = vmatpush.xpose.msra.mxu0 0.0
    %89 = vmatpush.xpose.msra.mxu0 0.0
    %90 = vmatpush.xpose.msra.mxu0 0.0
    %91 = vmatpush.xpose.msra.mxu0 0.0
    %92 = vmatpush.xpose.msra.mxu0 0.0
    %93 = vmatpush.xpose.msra.mxu0 0.0
    %94 = vmatpush.xpose.msra.mxu0 0.0
    %95 = vmatpush.xpose.msra.mxu0 0.0
    %96 = vmatpush.xpose.msra.mxu0 0.0
    %97 = vmatpush.xpose.msra.mxu0 0.0
    %98 = vmatpush.xpose.msra.mxu0 0.0
    %99 = vmatpush.xpose.msra.mxu0 %v82
    %100 = vmatmul.f32.gmra.mxu0 %v80
    %v101 = vpop.f32.mrf.mxu0
    %v102 = vadd.f32 0.0, %v101
    %103 = vdwg.mxu0
    %v104 = vsel %vm79, %v102, -inf
    %105 = vmax.xlane.f32.xlu0 %v104
    %v106 = vpop.xlane.xlu0 %105
    %v107 = vsub.f32 %v102, %v106
    %v108 = vmul.f32 %v107, 1.442695
    %v109 = vpow.pop %v108
    %v110 = vsel %vm79, %v109, 0.0
    %111 = vadd.xlane.f32.xlu0 %v110
    %v112 = vpop.xlane.xlu0 %111
    %v113 = vrcp.pop %v112
    %v114 = vmul.f32 %v112, %v113
    %v115 = vsub.f32 1.0, %v114
    %v116 = vmul.f32 %v113, %v115
    %v117 = vadd.f32 %v113, %v116
    %vm118 = vweird.f32 %v112
    %vm119 = vweird.f32 %v113
    %vm120 = vmor %vm118, %vm119
    %v121 = vsel %vm120, %v113, %v117
    %v122 = vand.u32 2147483647, %v112
    %vm123 = vcmp.eq.f32.partialorder %v122, 8.507059e+37
    %v124 = vand.u32 %v112, 2147483648
    %v125 = vor.u32 1.1754944e-38, %v124
    %v126 = vsel %vm123, %v125, %v121
    %v127 = vmul.f32 %v109, %v126
    %128 = vrot.lane.b32.xlu0 %v74, 64
    %v129 = vpop.permute.xlu0 %128
    %v132 = vsel %vm79, %v127, 0
    %134 = vmatpush.msra.mxu0 0.0
    %135 = vmatpush.msra.mxu0 0.0
    %136 = vmatpush.msra.mxu0 0.0
    %137 = vmatpush.msra.mxu0 0.0
    %138 = vmatpush.msra.mxu0 0.0
    %139 = vmatpush.msra.mxu0 0.0
    %140 = vmatpush.msra.mxu0 0.0
    %141 = vmatpush.msra.mxu0 0.0
    %142 = vmatpush.msra.mxu0 0.0
    %143 = vmatpush.msra.mxu0 0.0
    %144 = vmatpush.msra.mxu0 0.0
    %145 = vmatpush.msra.mxu0 0.0
    %146 = vmatpush.msra.mxu0 0.0
    %147 = vmatpush.msra.mxu0 0.0
    %148 = vmatpush.msra.mxu0 0.0
    %149 = vmatpush.msra.mxu0 %v129
    %150 = vmatmul.f32.gmra.mxu0 %v132
    %v151 = vpop.f32.mrf.mxu0
    %v152 = vadd.f32 0.0, %v151
    %153 = vdwg.mxu0
    %154 = vrot.lane.b32.xlu0 %v74, 120
    %v155 = vpop.permute.xlu0 %154
    %156 = vrot.lane.b32.xlu0 %v74, 88
    %v157 = vpop.permute.xlu0 %156
    %v158 = vsel %vm79, %v155, 0
    %v160 = vsel %vm79, %v157, 0
    %162 = vmatpush.xpose.msra.mxu0 0.0
    %163 = vmatpush.xpose.msra.mxu0 0.0
    %164 = vmatpush.xpose.msra.mxu0 0.0
    %165 = vmatpush.xpose.msra.mxu0 0.0
    %166 = vmatpush.xpose.msra.mxu0 0.0
    %167 = vmatpush.xpose.msra.mxu0 0.0
    %168 = vmatpush.xpose.msra.mxu0 0.0
    %169 = vmatpush.xpose.msra.mxu0 0.0
    %170 = vmatpush.xpose.msra.mxu0 0.0
    %171 = vmatpush.xpose.msra.mxu0 0.0
    %172 = vmatpush.xpose.msra.mxu0 0.0
    %173 = vmatpush.xpose.msra.mxu0 0.0
    %174 = vmatpush.xpose.msra.mxu0 0.0
    %175 = vmatpush.xpose.msra.mxu0 0.0
    %176 = vmatpush.xpose.msra.mxu0 0.0
    %177 = vmatpush.xpose.msra.mxu0 %v160
    %178 = vmatmul.f32.gmra.mxu0 %v158
    %v179 = vpop.f32.mrf.mxu0
    %v180 = vadd.f32 0.0, %v179
    %181 = vdwg.mxu0
    %v182 = vsel %vm79, %v180, -inf
    %183 = vmax.xlane.f32.xlu0 %v182
    %v184 = vpop.xlane.xlu0 %183
    %v185 = vsub.f32 %v180, %v184
    %v186 = vmul.f32 %v185, 1.442695
    %v187 = vpow.pop %v186
    %v188 = vsel %vm79, %v187, 0.0
    %189 = vadd.xlane.f32.xlu0 %v188
    %v190 = vpop.xlane.xlu0 %189
    %v191 = vrcp.pop %v190
    %v192 = vmul.f32 %v190, %v191
    %v193 = vsub.f32 1.0, %v192
    %v194 = vmul.f32 %v191, %v193
    %v195 = vadd.f32 %v191, %v194
    %vm196 = vweird.f32 %v190
    %vm197 = vweird.f32 %v191
    %vm198 = vmor %vm196, %vm197
    %v199 = vsel %vm198, %v191, %v195
    %v200 = vand.u32 2147483647, %v190
    %vm201 = vcmp.eq.f32.partialorder %v200, 8.507059e+37
    %v202 = vand.u32 %v190, 2147483648
    %v203 = vor.u32 1.1754944e-38, %v202
    %v204 = vsel %vm201, %v203, %v199
    %v205 = vmul.f32 %v187, %v204
    %206 = vrot.lane.b32.xlu0 %v74, 56
    %v207 = vpop.permute.xlu0 %206
    %v210 = vsel %vm79, %v205, 0
    %212 = vmatpush.msra.mxu0 0.0
    %213 = vmatpush.msra.mxu0 0.0
    %214 = vmatpush.msra.mxu0 0.0
    %215 = vmatpush.msra.mxu0 0.0
    %216 = vmatpush.msra.mxu0 0.0
    %217 = vmatpush.msra.mxu0 0.0
    %218 = vmatpush.msra.mxu0 0.0
    %219 = vmatpush.msra.mxu0 0.0
    %220 = vmatpush.msra.mxu0 0.0
    %221 = vmatpush.msra.mxu0 0.0
    %222 = vmatpush.msra.mxu0 0.0
    %223 = vmatpush.msra.mxu0 0.0
    %224 = vmatpush.msra.mxu0 0.0
    %225 = vmatpush.msra.mxu0 0.0
    %226 = vmatpush.msra.mxu0 0.0
    %227 = vmatpush.msra.mxu0 %v207
    %228 = vmatmul.f32.gmra.mxu0 %v210
    %v229 = vpop.f32.mrf.mxu0
    %v230 = vadd.f32 0.0, %v229
    %231 = vdwg.mxu0
    %232 = vrot.lane.b32.xlu0 %v74, 112
    %v233 = vpop.permute.xlu0 %232
    %234 = vrot.lane.b32.xlu0 %v74, 80
    %v235 = vpop.permute.xlu0 %234
    %v236 = vsel %vm79, %v233, 0
    %v238 = vsel %vm79, %v235, 0
    %240 = vmatpush.xpose.msra.mxu0 0.0
    %241 = vmatpush.xpose.msra.mxu0 0.0
    %242 = vmatpush.xpose.msra.mxu0 0.0
    %243 = vmatpush.xpose.msra.mxu0 0.0
    %244 = vmatpush.xpose.msra.mxu0 0.0
    %245 = vmatpush.xpose.msra.mxu0 0.0
    %246 = vmatpush.xpose.msra.mxu0 0.0
    %247 = vmatpush.xpose.msra.mxu0 0.0
    %248 = vmatpush.xpose.msra.mxu0 0.0
    %249 = vmatpush.xpose.msra.mxu0 0.0
    %250 = vmatpush.xpose.msra.mxu0 0.0
    %251 = vmatpush.xpose.msra.mxu0 0.0
    %252 = vmatpush.xpose.msra.mxu0 0.0
    %253 = vmatpush.xpose.msra.mxu0 0.0
    %254 = vmatpush.xpose.msra.mxu0 0.0
    %255 = vmatpush.xpose.msra.mxu0 %v238
    %256 = vmatmul.f32.gmra.mxu0 %v236
    %v257 = vpop.f32.mrf.mxu0
    %v258 = vadd.f32 0.0, %v257
    %259 = vdwg.mxu0
    %v260 = vsel %vm79, %v258, -inf
    %261 = vmax.xlane.f32.xlu0 %v260
    %v262 = vpop.xlane.xlu0 %261
    %v263 = vsub.f32 %v258, %v262
    %v264 = vmul.f32 %v263, 1.442695
    %v265 = vpow.pop %v264
    %v266 = vsel %vm79, %v265, 0.0
    %267 = vadd.xlane.f32.xlu0 %v266
    %v268 = vpop.xlane.xlu0 %267
    %v269 = vrcp.pop %v268
    %v270 = vmul.f32 %v268, %v269
    %v271 = vsub.f32 1.0, %v270
    %v272 = vmul.f32 %v269, %v271
    %v273 = vadd.f32 %v269, %v272
    %vm274 = vweird.f32 %v268
    %vm275 = vweird.f32 %v269
    %vm276 = vmor %vm274, %vm275
    %v277 = vsel %vm276, %v269, %v273
    %v278 = vand.u32 2147483647, %v268
    %vm279 = vcmp.eq.f32.partialorder %v278, 8.507059e+37
    %v280 = vand.u32 %v268, 2147483648
    %v281 = vor.u32 1.1754944e-38, %v280
    %v282 = vsel %vm279, %v281, %v277
    %v283 = vmul.f32 %v265, %v282
    %284 = vrot.lane.b32.xlu0 %v74, 48
    %v285 = vpop.permute.xlu0 %284
    %v288 = vsel %vm79, %v283, 0
    %290 = vmatpush.msra.mxu0 0.0
    %291 = vmatpush.msra.mxu0 0.0
    %292 = vmatpush.msra.mxu0 0.0
    %293 = vmatpush.msra.mxu0 0.0
    %294 = vmatpush.msra.mxu0 0.0
    %295 = vmatpush.msra.mxu0 0.0
    %296 = vmatpush.msra.mxu0 0.0
    %297 = vmatpush.msra.mxu0 0.0
    %298 = vmatpush.msra.mxu0 0.0
    %299 = vmatpush.msra.mxu0 0.0
    %300 = vmatpush.msra.mxu0 0.0
    %301 = vmatpush.msra.mxu0 0.0
    %302 = vmatpush.msra.mxu0 0.0
    %303 = vmatpush.msra.mxu0 0.0
    %304 = vmatpush.msra.mxu0 0.0
    %305 = vmatpush.msra.mxu0 %v285
    %306 = vmatmul.f32.gmra.mxu0 %v288
    %v307 = vpop.f32.mrf.mxu0
    %v308 = vadd.f32 0.0, %v307
    %309 = vdwg.mxu0
    %310 = vrot.lane.b32.xlu0 %v74, 104
    %v311 = vpop.permute.xlu0 %310
    %312 = vrot.lane.b32.xlu0 %v74, 72
    %v313 = vpop.permute.xlu0 %312
    %v314 = vsel %vm79, %v311, 0
    %v316 = vsel %vm79, %v313, 0
    %318 = vmatpush.xpose.msra.mxu0 0.0
    %319 = vmatpush.xpose.msra.mxu0 0.0
    %320 = vmatpush.xpose.msra.mxu0 0.0
    %321 = vmatpush.xpose.msra.mxu0 0.0
    %322 = vmatpush.xpose.msra.mxu0 0.0
    %323 = vmatpush.xpose.msra.mxu0 0.0
    %324 = vmatpush.xpose.msra.mxu0 0.0
    %325 = vmatpush.xpose.msra.mxu0 0.0
    %326 = vmatpush.xpose.msra.mxu0 0.0
    %327 = vmatpush.xpose.msra.mxu0 0.0
    %328 = vmatpush.xpose.msra.mxu0 0.0
    %329 = vmatpush.xpose.msra.mxu0 0.0
    %330 = vmatpush.xpose.msra.mxu0 0.0
    %331 = vmatpush.xpose.msra.mxu0 0.0
    %332 = vmatpush.xpose.msra.mxu0 0.0
    %333 = vmatpush.xpose.msra.mxu0 %v316
    %334 = vmatmul.f32.gmra.mxu0 %v314
    %v335 = vpop.f32.mrf.mxu0
    %v336 = vadd.f32 0.0, %v335
    %337 = vdwg.mxu0
    %v338 = vsel %vm79, %v336, -inf
    %339 = vmax.xlane.f32.xlu0 %v338
    %v340 = vpop.xlane.xlu0 %339
    %v341 = vsub.f32 %v336, %v340
    %v342 = vmul.f32 %v341, 1.442695
    %v343 = vpow.pop %v342
    %v344 = vsel %vm79, %v343, 0.0
    %345 = vadd.xlane.f32.xlu0 %v344
    %v346 = vpop.xlane.xlu0 %345
    %v347 = vrcp.pop %v346
    %v348 = vmul.f32 %v346, %v347
    %v349 = vsub.f32 1.0, %v348
    %v350 = vmul.f32 %v347, %v349
    %v351 = vadd.f32 %v347, %v350
    %vm352 = vweird.f32 %v346
    %vm353 = vweird.f32 %v347
    %vm354 = vmor %vm352, %vm353
    %v355 = vsel %vm354, %v347, %v351
    %v356 = vand.u32 2147483647, %v346
    %vm357 = vcmp.eq.f32.partialorder %v356, 8.507059e+37
    %v358 = vand.u32 %v346, 2147483648
    %v359 = vor.u32 1.1754944e-38, %v358
    %v360 = vsel %vm357, %v359, %v355
    %v361 = vmul.f32 %v343, %v360
    %362 = vrot.lane.b32.xlu0 %v74, 40
    %v363 = vpop.permute.xlu0 %362
    %v366 = vsel %vm79, %v361, 0
    %368 = vmatpush.msra.mxu0 0.0
    %369 = vmatpush.msra.mxu0 0.0
    %370 = vmatpush.msra.mxu0 0.0
    %371 = vmatpush.msra.mxu0 0.0
    %372 = vmatpush.msra.mxu0 0.0
    %373 = vmatpush.msra.mxu0 0.0
    %374 = vmatpush.msra.mxu0 0.0
    %375 = vmatpush.msra.mxu0 0.0
    %376 = vmatpush.msra.mxu0 0.0
    %377 = vmatpush.msra.mxu0 0.0
    %378 = vmatpush.msra.mxu0 0.0
    %379 = vmatpush.msra.mxu0 0.0
    %380 = vmatpush.msra.mxu0 0.0
    %381 = vmatpush.msra.mxu0 0.0
    %382 = vmatpush.msra.mxu0 0.0
    %383 = vmatpush.msra.mxu0 %v363
    %384 = vmatmul.f32.gmra.mxu0 %v366
    %v385 = vpop.f32.mrf.mxu0
    %v386 = vadd.f32 0.0, %v385
    %387 = vdwg.mxu0
    %389 = vrot.lane.b32.xlu0 %v230, 8
    %v390 = vpop.permute.xlu0 %389
    %393 = vrot.lane.b32.xlu0 %v308, 16
    %v394 = vpop.permute.xlu0 %393
    %397 = vrot.lane.b32.xlu0 %v386, 24
    %v398 = vpop.permute.xlu0 %397
    %v400 = vsel %vm79, %v152, %v390
    %vm401 = vcmask 130048
    %v402 = vsel %vm401, %v400, %v394
    %vm403 = vcmask 195584
    %v404 = vsel %vm403, %v402, %v398
    %409 = vrot.lane.b32.xlu0 %v21, 32
    %v410 = vpop.permute.xlu0 %409
    %411 = vrot.lane.b32.xlu0 %v22, 32
    %v412 = vpop.permute.xlu0 %411
    %413 = vrot.lane.b32.xlu0 %v23, 32
    %v414 = vpop.permute.xlu0 %413
    %415 = vrot.lane.b32.xlu0 %v24, 32
    %v416 = vpop.permute.xlu0 %415
    %421 = vrot.lane.b32.xlu0 %v50, 32
    %v422 = vpop.permute.xlu0 %421
    %v425 = vsel %vm52, %v404, 0
    %427 = vmatpush.msra.mxu0 0.0
    %428 = vmatpush.msra.mxu0 0.0
    %429 = vmatpush.msra.mxu0 0.0
    %430 = vmatpush.msra.mxu0 0.0
    %431 = vmatpush.msra.mxu0 0.0
    %432 = vmatpush.msra.mxu0 0.0
    %433 = vmatpush.msra.mxu0 0.0
    %434 = vmatpush.msra.mxu0 0.0
    %435 = vmatpush.msra.mxu0 0.0
    %436 = vmatpush.msra.mxu0 0.0
    %437 = vmatpush.msra.mxu0 0.0
    %438 = vmatpush.msra.mxu0 0.0
    %439 = vmatpush.msra.mxu0 %v416
    %440 = vmatpush.msra.mxu0 %v414
    %441 = vmatpush.msra.mxu0 %v412
    %442 = vmatpush.msra.mxu0 %v410
    %443 = vmatmul.f32.gmra.mxu0 %v425
    %v444 = vpop.f32.mrf.mxu0
    %v445 = vadd.f32 %v422, %v444
    %446 = vdwg.mxu0
    %v447 = vadd.f32 %v46, %v445
    %v448 = vsel %vm52, %v447, 0.0
    %449 = vadd.xlane.f32.xlu0 %v448
    %v450 = vpop.xlane.xlu0 %449
    %v451 = vrcp.pop 32.0
    %v452 = vmul.f32 32.0, %v451
    %v453 = vsub.f32 1.0, %v452
    %v454 = vmul.f32 %v451, %v453
    %v455 = vadd.f32 %v451, %v454
    %vm456 = vweird.f32 %v451
    %v457 = vsel %vm456, %v451, %v455
    %v458 = vmul.f32 %v450, %v457
    %v459 = vsub.f32 %v447, %v458
    %v460 = vmul.f32 %v459, %v459
    %v461 = vsel %vm52, %v460, 0.0
    %462 = vadd.xlane.f32.xlu0 %v461
    %v463 = vpop.xlane.xlu0 %462
    %v464 = vmul.f32 %v463, %v457
    %v465 = vadd.f32 %v464, 1e-05
    %v466 = vrsqrt.pop %v465
    %v467 = vmul.f32 %v466, %v465
    %v468 = vmul.f32 %v467, %v466
    %v469 = vmul.f32 0.5, %v468
    %v470 = vsub.f32 1.5, %v469
    %v471 = vmul.f32 %v466, %v470
    %vm472 = vweird.f32 %v465
    %vm473 = vweird.f32 %v466
    %vm474 = vmor %vm472, %vm473
    %v475 = vsel %vm474, %v466, %v471
    %v476 = vmul.f32 %v459, %v475
    %v478 = vperm.slane %v35, 0
    %479 = vrot.lane.b32.xlu0 %v478, 32
    %v480 = vpop.permute.xlu0 %479
    %v482 = vmul.f32 %v476, %v480
    %v484 = vperm.slane %v36, 0
    %v486 = vadd.f32 %v482, %v484
    %v488 = vperm.slane %v34, 0
    %v491 = vsel %vm52, %v486, 0
    %493 = vmatpush.msra.mxu0 0.0
    %494 = vmatpush.msra.mxu0 0.0
    %495 = vmatpush.msra.mxu0 0.0
    %496 = vmatpush.msra.mxu0 0.0
    %497 = vmatpush.msra.mxu0 0.0
    %498 = vmatpush.msra.mxu0 0.0
    %499 = vmatpush.msra.mxu0 0.0
    %500 = vmatpush.msra.mxu0 0.0
    %501 = vmatpush.msra.mxu0 0.0
    %502 = vmatpush.msra.mxu0 0.0
    %503 = vmatpush.msra.mxu0 0.0
    %504 = vmatpush.msra.mxu0 0.0
    %505 = vmatpush.msra.mxu0 %v28
    %506 = vmatpush.msra.mxu0 %v27
    %507 = vmatpush.msra.mxu0 %v26
    %508 = vmatpush.msra.mxu0 %v25
    %509 = vmatmul.f32.gmra.mxu0 %v491
    %v510 = vpop.f32.mrf.mxu0
    %v511 = vadd.f32 %v488, %v510
    %512 = vdwg.mxu0
    %517 = vrot.lane.b32.xlu0 %v25, 96
    %v518 = vpop.permute.xlu0 %517
    %519 = vrot.lane.b32.xlu0 %v26, 96
    %v520 = vpop.permute.xlu0 %519
    %521 = vrot.lane.b32.xlu0 %v27, 96
    %v522 = vpop.permute.xlu0 %521
    %523 = vrot.lane.b32.xlu0 %v28, 96
    %v524 = vpop.permute.xlu0 %523
    %529 = vrot.lane.b32.xlu0 %v488, 96
    %v530 = vpop.permute.xlu0 %529
    %v533 = vsel %vm52, %v47, 0
    %v536 = vsel %vm52, %v48, 0
    %538 = vmatpush.msra.mxu0 0.0
    %539 = vmatpush.msra.mxu0 0.0
    %540 = vmatpush.msra.mxu0 0.0
    %541 = vmatpush.msra.mxu0 0.0
    %542 = vmatpush.msra.mxu0 0.0
    %543 = vmatpush.msra.mxu0 0.0
    %544 = vmatpush.msra.mxu0 0.0
    %545 = vmatpush.msra.mxu0 0.0
    %546 = vmatpush.msra.mxu0 0.0
    %547 = vmatpush.msra.mxu0 0.0
    %548 = vmatpush.msra.mxu0 0.0
    %549 = vmatpush.msra.mxu0 0.0
    %550 = vmatpush.msra.mxu0 %v524
    %551 = vmatpush.msra.mxu0 %v522
    %552 = vmatpush.msra.mxu0 %v520
    %553 = vmatpush.msra.mxu0 %v518
    %554 = vmatmul.f32.gmra.mxu0 %v533
    %v555 = vpop.f32.mrf.mxu0
    %v556 = vadd.f32 %v530, %v555
    %557 = vmatmul.f32.gmra.mxu0 %v536
    %v558 = vpop.f32.mrf.mxu0
    %v559 = vadd.f32 %v530, %v558
    %560 = vdwg.mxu0
    %v562 = vsel %vm79, %v511, 0
    %v565 = vsel %vm79, %v556, 0
    %v568 = vsel %vm79, %v559, 0
    %570 = vmatpush.xpose.msra.mxu0 0.0
    %571 = vmatpush.xpose.msra.mxu0 0.0
    %572 = vmatpush.xpose.msra.mxu0 0.0
    %573 = vmatpush.xpose.msra.mxu0 0.0
    %574 = vmatpush.xpose.msra.mxu0 0.0
    %575 = vmatpush.xpose.msra.mxu0 0.0
    %576 = vmatpush.xpose.msra.mxu0 0.0
    %577 = vmatpush.xpose.msra.mxu0 0.0
    %578 = vmatpush.xpose.msra.mxu0 0.0
    %579 = vmatpush.xpose.msra.mxu0 0.0
    %580 = vmatpush.xpose.msra.mxu0 0.0
    %581 = vmatpush.xpose.msra.mxu0 0.0
    %582 = vmatpush.xpose.msra.mxu0 0.0
    %583 = vmatpush.xpose.msra.mxu0 0.0
    %584 = vmatpush.xpose.msra.mxu0 %v568
    %585 = vmatpush.xpose.msra.mxu0 %v565
    %586 = vmatmul.f32.gmra.mxu0 %v562
    %v587 = vpop.f32.mrf.mxu0
    %v588 = vadd.f32 0.0, %v587
    %589 = vdwg.mxu0
    %vm590 = vcmask 97280
    %v591 = vsel %vm590, %v588, -inf
    %592 = vmax.xlane.f32.xlu0 %v591
    %v593 = vpop.xlane.xlu0 %592
    %v594 = vsub.f32 %v588, %v593
    %v595 = vmul.f32 %v594, 1.442695
    %v596 = vpow.pop %v595
    %v597 = vsel %vm590, %v596, 0.0
    %598 = vadd.xlane.f32.xlu0 %v597
    %v599 = vpop.xlane.xlu0 %598
    %v600 = vrcp.pop %v599
    %v601 = vmul.f32 %v599, %v600
    %v602 = vsub.f32 1.0, %v601
    %v603 = vmul.f32 %v600, %v602
    %v604 = vadd.f32 %v600, %v603
    %vm605 = vweird.f32 %v599
    %vm606 = vweird.f32 %v600
    %vm607 = vmor %vm605, %vm606
    %v608 = vsel %vm607, %v600, %v604
    %v609 = vand.u32 2147483647, %v599
    %vm610 = vcmp.eq.f32.partialorder %v609, 8.507059e+37
    %v611 = vand.u32 %v599, 2147483648
    %v612 = vor.u32 1.1754944e-38, %v611
    %v613 = vsel %vm610, %v612, %v608
    %v614 = vmul.f32 %v596, %v613
    %615 = vrot.lane.b32.xlu0 %v556, 96
    %v616 = vpop.permute.xlu0 %615
    %617 = vrot.lane.b32.xlu0 %v559, 96
    %v618 = vpop.permute.xlu0 %617
    %v621 = vsel %vm590, %v614, 0
    %vm623 = vcmask 1043456
    %v624 = vsel %vm623, %v618, 0
    %626 = vmatpush.msra.mxu0 0.0
    %627 = vmatpush.msra.mxu0 0.0
    %628 = vmatpush.msra.mxu0 0.0
    %629 = vmatpush.msra.mxu0 0.0
    %630 = vmatpush.msra.mxu0 0.0
    %631 = vmatpush.msra.mxu0 0.0
    %632 = vmatpush.msra.mxu0 0.0
    %633 = vmatpush.msra.mxu0 0.0
    %634 = vmatpush.msra.mxu0 0.0
    %635 = vmatpush.msra.mxu0 0.0
    %636 = vmatpush.msra.mxu0 0.0
    %637 = vmatpush.msra.mxu0 0.0
    %638 = vmatpush.msra.mxu0 0.0
    %639 = vmatpush.msra.mxu0 0.0
    %640 = vmatpush.msra.mxu0 %v624
    %641 = vmatpush.msra.mxu0 %v616
    %642 = vmatmul.f32.gmra.mxu0 %v621
    %v643 = vpop.f32.mrf.mxu0
    %v644 = vadd.f32 0.0, %v643
    %645 = vdwg.mxu0
    %646 = vrot.lane.b32.xlu0 %v511, 120
    %v647 = vpop.permute.xlu0 %646
    %648 = vrot.lane.b32.xlu0 %v556, 120
    %v649 = vpop.permute.xlu0 %648
    %650 = vrot.lane.b32.xlu0 %v559, 120
    %v651 = vpop.permute.xlu0 %650
    %v652 = vsel %vm79, %v647, 0
    %v654 = vsel %vm79, %v649, 0
    %v656 = vsel %vm79, %v651, 0
    %658 = vmatpush.xpose.msra.mxu0 0.0
    %659 = vmatpush.xpose.msra.mxu0 0.0
    %660 = vmatpush.xpose.msra.mxu0 0.0
    %661 = vmatpush.xpose.msra.mxu0 0.0
    %662 = vmatpush.xpose.msra.mxu0 0.0
    %663 = vmatpush.xpose.msra.mxu0 0.0
    %664 = vmatpush.xpose.msra.mxu0 0.0
    %665 = vmatpush.xpose.msra.mxu0 0.0
    %666 = vmatpush.xpose.msra.mxu0 0.0
    %667 = vmatpush.xpose.msra.mxu0 0.0
    %668 = vmatpush.xpose.msra.mxu0 0.0
    %669 = vmatpush.xpose.msra.mxu0 0.0
    %670 = vmatpush.xpose.msra.mxu0 0.0
    %671 = vmatpush.xpose.msra.mxu0 0.0
    %672 = vmatpush.xpose.msra.mxu0 %v656
    %673 = vmatpush.xpose.msra.mxu0 %v654
    %674 = vmatmul.f32.gmra.mxu0 %v652
    %v675 = vpop.f32.mrf.mxu0
    %v676 = vadd.f32 0.0, %v675
    %677 = vdwg.mxu0
    %v678 = vsel %vm590, %v676, -inf
    %679 = vmax.xlane.f32.xlu0 %v678
    %v680 = vpop.xlane.xlu0 %679
    %v681 = vsub.f32 %v676, %v680
    %v682 = vmul.f32 %v681, 1.442695
    %v683 = vpow.pop %v682
    %v684 = vsel %vm590, %v683, 0.0
    %685 = vadd.xlane.f32.xlu0 %v684
    %v686 = vpop.xlane.xlu0 %685
    %v687 = vrcp.pop %v686
    %v688 = vmul.f32 %v686, %v687
    %v689 = vsub.f32 1.0, %v688
    %v690 = vmul.f32 %v687, %v689
    %v691 = vadd.f32 %v687, %v690
    %vm692 = vweird.f32 %v686
    %vm693 = vweird.f32 %v687
    %vm694 = vmor %vm692, %vm693
    %v695 = vsel %vm694, %v687, %v691
    %v696 = vand.u32 2147483647, %v686
    %vm697 = vcmp.eq.f32.partialorder %v696, 8.507059e+37
    %v698 = vand.u32 %v686, 2147483648
    %v699 = vor.u32 1.1754944e-38, %v698
    %v700 = vsel %vm697, %v699, %v695
    %v701 = vmul.f32 %v683, %v700
    %702 = vrot.lane.b32.xlu0 %v556, 88
    %v703 = vpop.permute.xlu0 %702
    %704 = vrot.lane.b32.xlu0 %v559, 88
    %v705 = vpop.permute.xlu0 %704
    %v708 = vsel %vm590, %v701, 0
    %v710 = vsel %vm623, %v705, 0
    %712 = vmatpush.msra.mxu0 0.0
    %713 = vmatpush.msra.mxu0 0.0
    %714 = vmatpush.msra.mxu0 0.0
    %715 = vmatpush.msra.mxu0 0.0
    %716 = vmatpush.msra.mxu0 0.0
    %717 = vmatpush.msra.mxu0 0.0
    %718 = vmatpush.msra.mxu0 0.0
    %719 = vmatpush.msra.mxu0 0.0
    %720 = vmatpush.msra.mxu0 0.0
    %721 = vmatpush.msra.mxu0 0.0
    %722 = vmatpush.msra.mxu0 0.0
    %723 = vmatpush.msra.mxu0 0.0
    %724 = vmatpush.msra.mxu0 0.0
    %725 = vmatpush.msra.mxu0 0.0
    %726 = vmatpush.msra.mxu0 %v710
    %727 = vmatpush.msra.mxu0 %v703
    %728 = vmatmul.f32.gmra.mxu0 %v708
    %v729 = vpop.f32.mrf.mxu0
    %v730 = vadd.f32 0.0, %v729
    %731 = vdwg.mxu0
    %732 = vrot.lane.b32.xlu0 %v511, 112
    %v733 = vpop.permute.xlu0 %732
    %734 = vrot.lane.b32.xlu0 %v556, 112
    %v735 = vpop.permute.xlu0 %734
    %736 = vrot.lane.b32.xlu0 %v559, 112
    %v737 = vpop.permute.xlu0 %736
    %v738 = vsel %vm79, %v733, 0
    %v740 = vsel %vm79, %v735, 0
    %v742 = vsel %vm79, %v737, 0
    %744 = vmatpush.xpose.msra.mxu0 0.0
    %745 = vmatpush.xpose.msra.mxu0 0.0
    %746 = vmatpush.xpose.msra.mxu0 0.0
    %747 = vmatpush.xpose.msra.mxu0 0.0
    %748 = vmatpush.xpose.msra.mxu0 0.0
    %749 = vmatpush.xpose.msra.mxu0 0.0
    %750 = vmatpush.xpose.msra.mxu0 0.0
    %751 = vmatpush.xpose.msra.mxu0 0.0
    %752 = vmatpush.xpose.msra.mxu0 0.0
    %753 = vmatpush.xpose.msra.mxu0 0.0
    %754 = vmatpush.xpose.msra.mxu0 0.0
    %755 = vmatpush.xpose.msra.mxu0 0.0
    %756 = vmatpush.xpose.msra.mxu0 0.0
    %757 = vmatpush.xpose.msra.mxu0 0.0
    %758 = vmatpush.xpose.msra.mxu0 %v742
    %759 = vmatpush.xpose.msra.mxu0 %v740
    %760 = vmatmul.f32.gmra.mxu0 %v738
    %v761 = vpop.f32.mrf.mxu0
    %v762 = vadd.f32 0.0, %v761
    %763 = vdwg.mxu0
    %v764 = vsel %vm590, %v762, -inf
    %765 = vmax.xlane.f32.xlu0 %v764
    %v766 = vpop.xlane.xlu0 %765
    %v767 = vsub.f32 %v762, %v766
    %v768 = vmul.f32 %v767, 1.442695
    %v769 = vpow.pop %v768
    %v770 = vsel %vm590, %v769, 0.0
    %771 = vadd.xlane.f32.xlu0 %v770
    %v772 = vpop.xlane.xlu0 %771
    %v773 = vrcp.pop %v772
    %v774 = vmul.f32 %v772, %v773
    %v775 = vsub.f32 1.0, %v774
    %v776 = vmul.f32 %v773, %v775
    %v777 = vadd.f32 %v773, %v776
    %vm778 = vweird.f32 %v772
    %vm779 = vweird.f32 %v773
    %vm780 = vmor %vm778, %vm779
    %v781 = vsel %vm780, %v773, %v777
    %v782 = vand.u32 2147483647, %v772
    %vm783 = vcmp.eq.f32.partialorder %v782, 8.507059e+37
    %v784 = vand.u32 %v772, 2147483648
    %v785 = vor.u32 1.1754944e-38, %v784
    %v786 = vsel %vm783, %v785, %v781
    %v787 = vmul.f32 %v769, %v786
    %788 = vrot.lane.b32.xlu0 %v556, 80
    %v789 = vpop.permute.xlu0 %788
    %790 = vrot.lane.b32.xlu0 %v559, 80
    %v791 = vpop.permute.xlu0 %790
    %v794 = vsel %vm590, %v787, 0
    %v796 = vsel %vm623, %v791, 0
    %798 = vmatpush.msra.mxu0 0.0
    %799 = vmatpush.msra.mxu0 0.0
    %800 = vmatpush.msra.mxu0 0.0
    %801 = vmatpush.msra.mxu0 0.0
    %802 = vmatpush.msra.mxu0 0.0
    %803 = vmatpush.msra.mxu0 0.0
    %804 = vmatpush.msra.mxu0 0.0
    %805 = vmatpush.msra.mxu0 0.0
    %806 = vmatpush.msra.mxu0 0.0
    %807 = vmatpush.msra.mxu0 0.0
    %808 = vmatpush.msra.mxu0 0.0
    %809 = vmatpush.msra.mxu0 0.0
    %810 = vmatpush.msra.mxu0 0.0
    %811 = vmatpush.msra.mxu0 0.0
    %812 = vmatpush.msra.mxu0 %v796
    %813 = vmatpush.msra.mxu0 %v789
    %814 = vmatmul.f32.gmra.mxu0 %v794
    %v815 = vpop.f32.mrf.mxu0
    %v816 = vadd.f32 0.0, %v815
    %817 = vdwg.mxu0
    %818 = vrot.lane.b32.xlu0 %v511, 104
    %v819 = vpop.permute.xlu0 %818
    %820 = vrot.lane.b32.xlu0 %v556, 104
    %v821 = vpop.permute.xlu0 %820
    %822 = vrot.lane.b32.xlu0 %v559, 104
    %v823 = vpop.permute.xlu0 %822
    %v824 = vsel %vm79, %v819, 0
    %v826 = vsel %vm79, %v821, 0
    %v828 = vsel %vm79, %v823, 0
    %830 = vmatpush.xpose.msra.mxu0 0.0
    %831 = vmatpush.xpose.msra.mxu0 0.0
    %832 = vmatpush.xpose.msra.mxu0 0.0
    %833 = vmatpush.xpose.msra.mxu0 0.0
    %834 = vmatpush.xpose.msra.mxu0 0.0
    %835 = vmatpush.xpose.msra.mxu0 0.0
    %836 = vmatpush.xpose.msra.mxu0 0.0
    %837 = vmatpush.xpose.msra.mxu0 0.0
    %838 = vmatpush.xpose.msra.mxu0 0.0
    %839 = vmatpush.xpose.msra.mxu0 0.0
    %840 = vmatpush.xpose.msra.mxu0 0.0
    %841 = vmatpush.xpose.msra.mxu0 0.0
    %842 = vmatpush.xpose.msra.mxu0 0.0
    %843 = vmatpush.xpose.msra.mxu0 0.0
    %844 = vmatpush.xpose.msra.mxu0 %v828
    %845 = vmatpush.xpose.msra.mxu0 %v826
    %846 = vmatmul.f32.gmra.mxu0 %v824
    %v847 = vpop.f32.mrf.mxu0
    %v848 = vadd.f32 0.0, %v847
    %849 = vdwg.mxu0
    %v850 = vsel %vm590, %v848, -inf
    %851 = vmax.xlane.f32.xlu0 %v850
    %v852 = vpop.xlane.xlu0 %851
    %v853 = vsub.f32 %v848, %v852
    %v854 = vmul.f32 %v853, 1.442695
    %v855 = vpow.pop %v854
    %v856 = vsel %vm590, %v855, 0.0
    %857 = vadd.xlane.f32.xlu0 %v856
    %v858 = vpop.xlane.xlu0 %857
    %v859 = vrcp.pop %v858
    %v860 = vmul.f32 %v858, %v859
    %v861 = vsub.f32 1.0, %v860
    %v862 = vmul.f32 %v859, %v861
    %v863 = vadd.f32 %v859, %v862
    %vm864 = vweird.f32 %v858
    %vm865 = vweird.f32 %v859
    %vm866 = vmor %vm864, %vm865
    %v867 = vsel %vm866, %v859, %v863
    %v868 = vand.u32 2147483647, %v858
    %vm869 = vcmp.eq.f32.partialorder %v868, 8.507059e+37
    %v870 = vand.u32 %v858, 2147483648
    %v871 = vor.u32 1.1754944e-38, %v870
    %v872 = vsel %vm869, %v871, %v867
    %v873 = vmul.f32 %v855, %v872
    %874 = vrot.lane.b32.xlu0 %v556, 72
    %v875 = vpop.permute.xlu0 %874
    %876 = vrot.lane.b32.xlu0 %v559, 72
    %v877 = vpop.permute.xlu0 %876
    %v880 = vsel %vm590, %v873, 0
    %v882 = vsel %vm623, %v877, 0
    %884 = vmatpush.msra.mxu0 0.0
    %885 = vmatpush.msra.mxu0 0.0
    %886 = vmatpush.msra.mxu0 0.0
    %887 = vmatpush.msra.mxu0 0.0
    %888 = vmatpush.msra.mxu0 0.0
    %889 = vmatpush.msra.mxu0 0.0
    %890 = vmatpush.msra.mxu0 0.0
    %891 = vmatpush.msra.mxu0 0.0
    %892 = vmatpush.msra.mxu0 0.0
    %893 = vmatpush.msra.mxu0 0.0
    %894 = vmatpush.msra.mxu0 0.0
    %895 = vmatpush.msra.mxu0 0.0
    %896 = vmatpush.msra.mxu0 0.0
    %897 = vmatpush.msra.mxu0 0.0
    %898 = vmatpush.msra.mxu0 %v882
    %899 = vmatpush.msra.mxu0 %v875
    %900 = vmatmul.f32.gmra.mxu0 %v880
    %v901 = vpop.f32.mrf.mxu0
    %v902 = vadd.f32 0.0, %v901
    %903 = vdwg.mxu0
    %905 = vrot.lane.b32.xlu0 %v730, 8
    %v906 = vpop.permute.xlu0 %905
    %909 = vrot.lane.b32.xlu0 %v816, 16
    %v910 = vpop.permute.xlu0 %909
    %913 = vrot.lane.b32.xlu0 %v902, 24
    %v914 = vpop.permute.xlu0 %913
    %v916 = vsel %vm79, %v644, %v906
    %v917 = vsel %vm401, %v916, %v910
    %v918 = vsel %vm403, %v917, %v914
    %919 = vrot.lane.b32.xlu0 %v25, 32
    %v920 = vpop.permute.xlu0 %919
    %921 = vrot.lane.b32.xlu0 %v26, 32
    %v922 = vpop.permute.xlu0 %921
    %923 = vrot.lane.b32.xlu0 %v27, 32
    %v924 = vpop.permute.xlu0 %923
    %925 = vrot.lane.b32.xlu0 %v28, 32
    %v926 = vpop.permute.xlu0 %925
    %931 = vrot.lane.b32.xlu0 %v488, 32
    %v932 = vpop.permute.xlu0 %931
    %v935 = vsel %vm52, %v918, 0
    %937 = vmatpush.msra.mxu0 0.0
    %938 = vmatpush.msra.mxu0 0.0
    %939 = vmatpush.msra.mxu0 0.0
    %940 = vmatpush.msra.mxu0 0.0
    %941 = vmatpush.msra.mxu0 0.0
    %942 = vmatpush.msra.mxu0 0.0
    %943 = vmatpush.msra.mxu0 0.0
    %944 = vmatpush.msra.mxu0 0.0
    %945 = vmatpush.msra.mxu0 0.0
    %946 = vmatpush.msra.mxu0 0.0
    %947 = vmatpush.msra.mxu0 0.0
    %948 = vmatpush.msra.mxu0 0.0
    %949 = vmatpush.msra.mxu0 %v926
    %950 = vmatpush.msra.mxu0 %v924
    %951 = vmatpush.msra.mxu0 %v922
    %952 = vmatpush.msra.mxu0 %v920
    %953 = vmatmul.f32.gmra.mxu0 %v935
    %v954 = vpop.f32.mrf.mxu0
    %v955 = vadd.f32 %v932, %v954
    %956 = vdwg.mxu0
    %v957 = vadd.f32 %v486, %v955
    %v958 = vsel %vm52, %v957, 0.0
    %959 = vadd.xlane.f32.xlu0 %v958
    %v960 = vpop.xlane.xlu0 %959
    %v961 = vmul.f32 %v960, %v457
    %v962 = vsub.f32 %v957, %v961
    %v963 = vmul.f32 %v962, %v962
    %v964 = vsel %vm52, %v963, 0.0
    %965 = vadd.xlane.f32.xlu0 %v964
    %v966 = vpop.xlane.xlu0 %965
    %v967 = vmul.f32 %v966, %v457
    %v968 = vadd.f32 %v967, 1e-05
    %v969 = vrsqrt.pop %v968
    %v970 = vmul.f32 %v969, %v968
    %v971 = vmul.f32 %v970, %v969
    %v972 = vmul.f32 0.5, %v971
    %v973 = vsub.f32 1.5, %v972
    %v974 = vmul.f32 %v969, %v973
    %vm975 = vweird.f32 %v968
    %vm976 = vweird.f32 %v969
    %vm977 = vmor %vm975, %vm976
    %v978 = vsel %vm977, %v969, %v974
    %v979 = vmul.f32 %v962, %v978
    %980 = vrot.lane.b32.xlu0 %v484, 96
    %v981 = vpop.permute.xlu0 %980
    %v983 = vmul.f32 %v979, %v981
    %984 = vrot.lane.b32.xlu0 %v484, 64
    %v985 = vpop.permute.xlu0 %984
    %v987 = vadd.f32 %v983, %v985
    %v990 = vsel %vm52, %v987, 0
    %992 = vmatpush.msra.mxu0 0.0
    %993 = vmatpush.msra.mxu0 0.0
    %994 = vmatpush.msra.mxu0 0.0
    %995 = vmatpush.msra.mxu0 0.0
    %996 = vmatpush.msra.mxu0 0.0
    %997 = vmatpush.msra.mxu0 0.0
    %998 = vmatpush.msra.mxu0 0.0
    %999 = vmatpush.msra.mxu0 0.0
    %1000 = vmatpush.msra.mxu0 0.0
    %1001 = vmatpush.msra.mxu0 0.0
    %1002 = vmatpush.msra.mxu0 0.0
    %1003 = vmatpush.msra.mxu0 0.0
    %1004 = vmatpush.msra.mxu0 %v32
    %1005 = vmatpush.msra.mxu0 %v31
    %1006 = vmatpush.msra.mxu0 %v30
    %1007 = vmatpush.msra.mxu0 %v29
    %1008 = vmatmul.f32.gmra.mxu0 %v990
    %v1009 = vpop.f32.mrf.mxu0
    %v1010 = vadd.f32 %v478, %v1009
    %1011 = vdwg.mxu0
    %v1012 = vmax.f32 %v1010, 0.0
    %1013 = vrot.lane.b32.xlu0 %v478, 64
    %v1014 = vpop.permute.xlu0 %1013
    %vm1016 = vcmask 523264
    %v1018 = vsel %vm1016, %v1012, 0
    %1020 = vmatpush.msra.mxu0 0.0
    %1021 = vmatpush.msra.mxu0 0.0
    %1022 = vmatpush.msra.mxu0 0.0
    %1023 = vmatpush.msra.mxu0 0.0
    %1024 = vmatpush.msra.mxu0 0.0
    %1025 = vmatpush.msra.mxu0 0.0
    %1026 = vmatpush.msra.mxu0 0.0
    %1027 = vmatpush.msra.mxu0 0.0
    %1028 = vmatpush.msra.mxu0 %v45
    %1029 = vmatpush.msra.mxu0 %v44
    %1030 = vmatpush.msra.mxu0 %v43
    %1031 = vmatpush.msra.mxu0 %v42
    %1032 = vmatpush.msra.mxu0 %v41
    %1033 = vmatpush.msra.mxu0 %v40
    %1034 = vmatpush.msra.mxu0 %v39
    %1035 = vmatpush.msra.mxu0 %v38
    %1036 = vmatmul.f32.gmra.mxu0 %v1018
    %v1037 = vpop.f32.mrf.mxu0
    %v1038 = vadd.f32 %v1014, %v1037
    %1039 = vdwg.mxu0
    %v1040 = vadd.f32 %v987, %v1038
    %v1041 = vsel %vm52, %v1040, 0.0
    %1042 = vadd.xlane.f32.xlu0 %v1041
    %v1043 = vpop.xlane.xlu0 %1042
    %v1044 = vmul.f32 %v1043, %v457
    %v1045 = vsub.f32 %v1040, %v1044
    %v1046 = vmul.f32 %v1045, %v1045
    %v1047 = vsel %vm52, %v1046, 0.0
    %1048 = vadd.xlane.f32.xlu0 %v1047
    %v1049 = vpop.xlane.xlu0 %1048
    %v1050 = vmul.f32 %v1049, %v457
    %v1051 = vadd.f32 %v1050, 1e-05
    %v1052 = vrsqrt.pop %v1051
    %v1053 = vmul.f32 %v1052, %v1051
    %v1054 = vmul.f32 %v1053, %v1052
    %v1055 = vmul.f32 0.5, %v1054
    %v1056 = vsub.f32 1.5, %v1055
    %v1057 = vmul.f32 %v1052, %v1056
    %vm1058 = vweird.f32 %v1051
    %vm1059 = vweird.f32 %v1052
    %vm1060 = vmor %vm1058, %vm1059
    %v1061 = vsel %vm1060, %v1052, %v1057
    %v1062 = vmul.f32 %v1045, %v1061
    %1063 = vrot.lane.b32.xlu0 %v484, 32
    %v1064 = vpop.permute.xlu0 %1063
    %v1066 = vmul.f32 %v1062, %v1064
    %v1068 = vperm.slane %v37, 0
    %v1070 = vadd.f32 %v1066, %v1068
    %1071 = vst.msk [vmem:[#allocation2] sm:$0xff] %vm52, %v1070
    %s1072 = scalar_lea.vmem %s0, 8
    %v1073 = vld [vmem:[%s1072] sm:$0xff]
    %s1074 = scalar_lea.vmem %s1, 16
    %v1075 = vld [vmem:[%s1074] sm:$0xff]
    %v1076 = vld [vmem:[%s1074 + $0x8] sm:$0xf]
    %v1078 = vsel %vm52, %v1073, 0
    %1080 = vmatpush.msra.mxu0 0.0
    %1081 = vmatpush.msra.mxu0 0.0
    %1082 = vmatpush.msra.mxu0 0.0
    %1083 = vmatpush.msra.mxu0 0.0
    %1084 = vmatpush.msra.mxu0 0.0
    %1085 = vmatpush.msra.mxu0 0.0
    %1086 = vmatpush.msra.mxu0 0.0
    %1087 = vmatpush.msra.mxu0 0.0
    %1088 = vmatpush.msra.mxu0 0.0
    %1089 = vmatpush.msra.mxu0 0.0
    %1090 = vmatpush.msra.mxu0 0.0
    %1091 = vmatpush.msra.mxu0 0.0
    %1092 = vmatpush.msra.mxu0 %v24
    %1093 = vmatpush.msra.mxu0 %v23
    %1094 = vmatpush.msra.mxu0 %v22
    %1095 = vmatpush.msra.mxu0 %v21
    %1096 = vmatmul.f32.gmra.mxu0 %v1078
    %v1097 = vpop.f32.mrf.mxu0
    %v1098 = vadd.f32 %v50, %v1097
    %1099 = vdwg.mxu0
    %1101 = vrot.lane.b32.xlu0 %v1098, 96
    %v1102 = vpop.permute.xlu0 %1101
    %v1103 = vsel %vm79, %v1098, 0
    %v1105 = vsel %vm79, %v1102, 0
    %1107 = vmatpush.xpose.msra.mxu0 0.0
    %1108 = vmatpush.xpose.msra.mxu0 0.0
    %1109 = vmatpush.xpose.msra.mxu0 0.0
    %1110 = vmatpush.xpose.msra.mxu0 0.0
    %1111 = vmatpush.xpose.msra.mxu0 0.0
    %1112 = vmatpush.xpose.msra.mxu0 0.0
    %1113 = vmatpush.xpose.msra.mxu0 0.0
    %1114 = vmatpush.xpose.msra.mxu0 0.0
    %1115 = vmatpush.xpose.msra.mxu0 0.0
    %1116 = vmatpush.xpose.msra.mxu0 0.0
    %1117 = vmatpush.xpose.msra.mxu0 0.0
    %1118 = vmatpush.xpose.msra.mxu0 0.0
    %1119 = vmatpush.xpose.msra.mxu0 0.0
    %1120 = vmatpush.xpose.msra.mxu0 0.0
    %1121 = vmatpush.xpose.msra.mxu0 0.0
    %1122 = vmatpush.xpose.msra.mxu0 %v1105
    %1123 = vmatmul.f32.gmra.mxu0 %v1103
    %v1124 = vpop.f32.mrf.mxu0
    %v1125 = vadd.f32 0.0, %v1124
    %1126 = vdwg.mxu0
    %v1127 = vsel %vm79, %v1125, -inf
    %1128 = vmax.xlane.f32.xlu0 %v1127
    %v1129 = vpop.xlane.xlu0 %1128
    %v1130 = vsub.f32 %v1125, %v1129
    %v1131 = vmul.f32 %v1130, 1.442695
    %v1132 = vpow.pop %v1131
    %v1133 = vsel %vm79, %v1132, 0.0
    %1134 = vadd.xlane.f32.xlu0 %v1133
    %v1135 = vpop.xlane.xlu0 %1134
    %v1136 = vrcp.pop %v1135
    %v1137 = vmul.f32 %v1135, %v1136
    %v1138 = vsub.f32 1.0, %v1137
    %v1139 = vmul.f32 %v1136, %v1138
    %v1140 = vadd.f32 %v1136, %v1139
    %vm1141 = vweird.f32 %v1135
    %vm1142 = vweird.f32 %v1136
    %vm1143 = vmor %vm1141, %vm1142
    %v1144 = vsel %vm1143, %v1136, %v1140
    %v1145 = vand.u32 2147483647, %v1135
    %vm1146 = vcmp.eq.f32.partialorder %v1145, 8.507059e+37
    %v1147 = vand.u32 %v1135, 2147483648
    %v1148 = vor.u32 1.1754944e-38, %v1147
    %v1149 = vsel %vm1146, %v1148, %v1144
    %v1150 = vmul.f32 %v1132, %v1149
    %1151 = vrot.lane.b32.xlu0 %v1098, 64
    %v1152 = vpop.permute.xlu0 %1151
    %v1155 = vsel %vm79, %v1150, 0
    %1157 = vmatpush.msra.mxu0 0.0
    %1158 = vmatpush.msra.mxu0 0.0
    %1159 = vmatpush.msra.mxu0 0.0
    %1160 = vmatpush.msra.mxu0 0.0
    %1161 = vmatpush.msra.mxu0 0.0
    %1162 = vmatpush.msra.mxu0 0.0
    %1163 = vmatpush.msra.mxu0 0.0
    %1164 = vmatpush.msra.mxu0 0.0
    %1165 = vmatpush.msra.mxu0 0.0
    %1166 = vmatpush.msra.mxu0 0.0
    %1167 = vmatpush.msra.mxu0 0.0
    %1168 = vmatpush.msra.mxu0 0.0
    %1169 = vmatpush.msra.mxu0 0.0
    %1170 = vmatpush.msra.mxu0 0.0
    %1171 = vmatpush.msra.mxu0 0.0
    %1172 = vmatpush.msra.mxu0 %v1152
    %1173 = vmatmul.f32.gmra.mxu0 %v1155
    %v1174 = vpop.f32.mrf.mxu0
    %v1175 = vadd.f32 0.0, %v1174
    %1176 = vdwg.mxu0
    %1177 = vrot.lane.b32.xlu0 %v1098, 120
    %v1178 = vpop.permute.xlu0 %1177
    %1179 = vrot.lane.b32.xlu0 %v1098, 88
    %v1180 = vpop.permute.xlu0 %1179
    %v1181 = vsel %vm79, %v1178, 0
    %v1183 = vsel %vm79, %v1180, 0
    %1185 = vmatpush.xpose.msra.mxu0 0.0
    %1186 = vmatpush.xpose.msra.mxu0 0.0
    %1187 = vmatpush.xpose.msra.mxu0 0.0
    %1188 = vmatpush.xpose.msra.mxu0 0.0
    %1189 = vmatpush.xpose.msra.mxu0 0.0
    %1190 = vmatpush.xpose.msra.mxu0 0.0
    %1191 = vmatpush.xpose.msra.mxu0 0.0
    %1192 = vmatpush.xpose.msra.mxu0 0.0
    %1193 = vmatpush.xpose.msra.mxu0 0.0
    %1194 = vmatpush.xpose.msra.mxu0 0.0
    %1195 = vmatpush.xpose.msra.mxu0 0.0
    %1196 = vmatpush.xpose.msra.mxu0 0.0
    %1197 = vmatpush.xpose.msra.mxu0 0.0
    %1198 = vmatpush.xpose.msra.mxu0 0.0
    %1199 = vmatpush.xpose.msra.mxu0 0.0
    %1200 = vmatpush.xpose.msra.mxu0 %v1183
    %1201 = vmatmul.f32.gmra.mxu0 %v1181
    %v1202 = vpop.f32.mrf.mxu0
    %v1203 = vadd.f32 0.0, %v1202
    %1204 = vdwg.mxu0
    %v1205 = vsel %vm79, %v1203, -inf
    %1206 = vmax.xlane.f32.xlu0 %v1205
    %v1207 = vpop.xlane.xlu0 %1206
    %v1208 = vsub.f32 %v1203, %v1207
    %v1209 = vmul.f32 %v1208, 1.442695
    %v1210 = vpow.pop %v1209
    %v1211 = vsel %vm79, %v1210, 0.0
    %1212 = vadd.xlane.f32.xlu0 %v1211
    %v1213 = vpop.xlane.xlu0 %1212
    %v1214 = vrcp.pop %v1213
    %v1215 = vmul.f32 %v1213, %v1214
    %v1216 = vsub.f32 1.0, %v1215
    %v1217 = vmul.f32 %v1214, %v1216
    %v1218 = vadd.f32 %v1214, %v1217
    %vm1219 = vweird.f32 %v1213
    %vm1220 = vweird.f32 %v1214
    %vm1221 = vmor %vm1219, %vm1220
    %v1222 = vsel %vm1221, %v1214, %v1218
    %v1223 = vand.u32 2147483647, %v1213
    %vm1224 = vcmp.eq.f32.partialorder %v1223, 8.507059e+37
    %v1225 = vand.u32 %v1213, 2147483648
    %v1226 = vor.u32 1.1754944e-38, %v1225
    %v1227 = vsel %vm1224, %v1226, %v1222
    %v1228 = vmul.f32 %v1210, %v1227
    %1229 = vrot.lane.b32.xlu0 %v1098, 56
    %v1230 = vpop.permute.xlu0 %1229
    %v1233 = vsel %vm79, %v1228, 0
    %1235 = vmatpush.msra.mxu0 0.0
    %1236 = vmatpush.msra.mxu0 0.0
    %1237 = vmatpush.msra.mxu0 0.0
    %1238 = vmatpush.msra.mxu0 0.0
    %1239 = vmatpush.msra.mxu0 0.0
    %1240 = vmatpush.msra.mxu0 0.0
    %1241 = vmatpush.msra.mxu0 0.0
    %1242 = vmatpush.msra.mxu0 0.0
    %1243 = vmatpush.msra.mxu0 0.0
    %1244 = vmatpush.msra.mxu0 0.0
    %1245 = vmatpush.msra.mxu0 0.0
    %1246 = vmatpush.msra.mxu0 0.0
    %1247 = vmatpush.msra.mxu0 0.0
    %1248 = vmatpush.msra.mxu0 0.0
    %1249 = vmatpush.msra.mxu0 0.0
    %1250 = vmatpush.msra.mxu0 %v1230
    %1251 = vmatmul.f32.gmra.mxu0 %v1233
    %v1252 = vpop.f32.mrf.mxu0
    %v1253 = vadd.f32 0.0, %v1252
    %1254 = vdwg.mxu0
    %1255 = vrot.lane.b32.xlu0 %v1098, 112
    %v1256 = vpop.permute.xlu0 %1255
    %1257 = vrot.lane.b32.xlu0 %v1098, 80
    %v1258 = vpop.permute.xlu0 %1257
    %v1259 = vsel %vm79, %v1256, 0
    %v1261 = vsel %vm79, %v1258, 0
    %1263 = vmatpush.xpose.msra.mxu0 0.0
    %1264 = vmatpush.xpose.msra.mxu0 0.0
    %1265 = vmatpush.xpose.msra.mxu0 0.0
    %1266 = vmatpush.xpose.msra.mxu0 0.0
    %1267 = vmatpush.xpose.msra.mxu0 0.0
    %1268 = vmatpush.xpose.msra.mxu0 0.0
    %1269 = vmatpush.xpose.msra.mxu0 0.0
    %1270 = vmatpush.xpose.msra.mxu0 0.0
    %1271 = vmatpush.xpose.msra.mxu0 0.0
    %1272 = vmatpush.xpose.msra.mxu0 0.0
    %1273 = vmatpush.xpose.msra.mxu0 0.0
    %1274 = vmatpush.xpose.msra.mxu0 0.0
    %1275 = vmatpush.xpose.msra.mxu0 0.0
    %1276 = vmatpush.xpose.msra.mxu0 0.0
    %1277 = vmatpush.xpose.msra.mxu0 0.0
    %1278 = vmatpush.xpose.msra.mxu0 %v1261
    %1279 = vmatmul.f32.gmra.mxu0 %v1259
    %v1280 = vpop.f32.mrf.mxu0
    %v1281 = vadd.f32 0.0, %v1280
    %1282 = vdwg.mxu0
    %v1283 = vsel %vm79, %v1281, -inf
    %1284 = vmax.xlane.f32.xlu0 %v1283
    %v1285 = vpop.xlane.xlu0 %1284
    %v1286 = vsub.f32 %v1281, %v1285
    %v1287 = vmul.f32 %v1286, 1.442695
    %v1288 = vpow.pop %v1287
    %v1289 = vsel %vm79, %v1288, 0.0
    %1290 = vadd.xlane.f32.xlu0 %v1289
    %v1291 = vpop.xlane.xlu0 %1290
    %v1292 = vrcp.pop %v1291
    %v1293 = vmul.f32 %v1291, %v1292
    %v1294 = vsub.f32 1.0, %v1293
    %v1295 = vmul.f32 %v1292, %v1294
    %v1296 = vadd.f32 %v1292, %v1295
    %vm1297 = vweird.f32 %v1291
    %vm1298 = vweird.f32 %v1292
    %vm1299 = vmor %vm1297, %vm1298
    %v1300 = vsel %vm1299, %v1292, %v1296
    %v1301 = vand.u32 2147483647, %v1291
    %vm1302 = vcmp.eq.f32.partialorder %v1301, 8.507059e+37
    %v1303 = vand.u32 %v1291, 2147483648
    %v1304 = vor.u32 1.1754944e-38, %v1303
    %v1305 = vsel %vm1302, %v1304, %v1300
    %v1306 = vmul.f32 %v1288, %v1305
    %1307 = vrot.lane.b32.xlu0 %v1098, 48
    %v1308 = vpop.permute.xlu0 %1307
    %v1311 = vsel %vm79, %v1306, 0
    %1313 = vmatpush.msra.mxu0 0.0
    %1314 = vmatpush.msra.mxu0 0.0
    %1315 = vmatpush.msra.mxu0 0.0
    %1316 = vmatpush.msra.mxu0 0.0
    %1317 = vmatpush.msra.mxu0 0.0
    %1318 = vmatpush.msra.mxu0 0.0
    %1319 = vmatpush.msra.mxu0 0.0
    %1320 = vmatpush.msra.mxu0 0.0
    %1321 = vmatpush.msra.mxu0 0.0
    %1322 = vmatpush.msra.mxu0 0.0
    %1323 = vmatpush.msra.mxu0 0.0
    %1324 = vmatpush.msra.mxu0 0.0
    %1325 = vmatpush.msra.mxu0 0.0
    %1326 = vmatpush.msra.mxu0 0.0
    %1327 = vmatpush.msra.mxu0 0.0
    %1328 = vmatpush.msra.mxu0 %v1308
    %1329 = vmatmul.f32.gmra.mxu0 %v1311
    %v1330 = vpop.f32.mrf.mxu0
    %v1331 = vadd.f32 0.0, %v1330
    %1332 = vdwg.mxu0
    %1333 = vrot.lane.b32.xlu0 %v1098, 104
    %v1334 = vpop.permute.xlu0 %1333
    %1335 = vrot.lane.b32.xlu0 %v1098, 72
    %v1336 = vpop.permute.xlu0 %1335
    %v1337 = vsel %vm79, %v1334, 0
    %v1339 = vsel %vm79, %v1336, 0
    %1341 = vmatpush.xpose.msra.mxu0 0.0
    %1342 = vmatpush.xpose.msra.mxu0 0.0
    %1343 = vmatpush.xpose.msra.mxu0 0.0
    %1344 = vmatpush.xpose.msra.mxu0 0.0
    %1345 = vmatpush.xpose.msra.mxu0 0.0
    %1346 = vmatpush.xpose.msra.mxu0 0.0
    %1347 = vmatpush.xpose.msra.mxu0 0.0
    %1348 = vmatpush.xpose.msra.mxu0 0.0
    %1349 = vmatpush.xpose.msra.mxu0 0.0
    %1350 = vmatpush.xpose.msra.mxu0 0.0
    %1351 = vmatpush.xpose.msra.mxu0 0.0
    %1352 = vmatpush.xpose.msra.mxu0 0.0
    %1353 = vmatpush.xpose.msra.mxu0 0.0
    %1354 = vmatpush.xpose.msra.mxu0 0.0
    %1355 = vmatpush.xpose.msra.mxu0 0.0
    %1356 = vmatpush.xpose.msra.mxu0 %v1339
    %1357 = vmatmul.f32.gmra.mxu0 %v1337
    %v1358 = vpop.f32.mrf.mxu0
    %v1359 = vadd.f32 0.0, %v1358
    %1360 = vdwg.mxu0
    %v1361 = vsel %vm79, %v1359, -inf
    %1362 = vmax.xlane.f32.xlu0 %v1361
    %v1363 = vpop.xlane.xlu0 %1362
    %v1364 = vsub.f32 %v1359, %v1363
    %v1365 = vmul.f32 %v1364, 1.442695
    %v1366 = vpow.pop %v1365
    %v1367 = vsel %vm79, %v1366, 0.0
    %1368 = vadd.xlane.f32.xlu0 %v1367
    %v1369 = vpop.xlane.xlu0 %1368
    %v1370 = vrcp.pop %v1369
    %v1371 = vmul.f32 %v1369, %v1370
    %v1372 = vsub.f32 1.0, %v1371
    %v1373 = vmul.f32 %v1370, %v1372
    %v1374 = vadd.f32 %v1370, %v1373
    %vm1375 = vweird.f32 %v1369
    %vm1376 = vweird.f32 %v1370
    %vm1377 = vmor %vm1375, %vm1376
    %v1378 = vsel %vm1377, %v1370, %v1374
    %v1379 = vand.u32 2147483647, %v1369
    %vm1380 = vcmp.eq.f32.partialorder %v1379, 8.507059e+37
    %v1381 = vand.u32 %v1369, 2147483648
    %v1382 = vor.u32 1.1754944e-38, %v1381
    %v1383 = vsel %vm1380, %v1382, %v1378
    %v1384 = vmul.f32 %v1366, %v1383
    %1385 = vrot.lane.b32.xlu0 %v1098, 40
    %v1386 = vpop.permute.xlu0 %1385
    %v1389 = vsel %vm79, %v1384, 0
    %1391 = vmatpush.msra.mxu0 0.0
    %1392 = vmatpush.msra.mxu0 0.0
    %1393 = vmatpush.msra.mxu0 0.0
    %1394 = vmatpush.msra.mxu0 0.0
    %1395 = vmatpush.msra.mxu0 0.0
    %1396 = vmatpush.msra.mxu0 0.0
    %1397 = vmatpush.msra.mxu0 0.0
    %1398 = vmatpush.msra.mxu0 0.0
    %1399 = vmatpush.msra.mxu0 0.0
    %1400 = vmatpush.msra.mxu0 0.0
    %1401 = vmatpush.msra.mxu0 0.0
    %1402 = vmatpush.msra.mxu0 0.0
    %1403 = vmatpush.msra.mxu0 0.0
    %1404 = vmatpush.msra.mxu0 0.0
    %1405 = vmatpush.msra.mxu0 0.0
    %1406 = vmatpush.msra.mxu0 %v1386
    %1407 = vmatmul.f32.gmra.mxu0 %v1389
    %v1408 = vpop.f32.mrf.mxu0
    %v1409 = vadd.f32 0.0, %v1408
    %1410 = vdwg.mxu0
    %1412 = vrot.lane.b32.xlu0 %v1253, 8
    %v1413 = vpop.permute.xlu0 %1412
    %1416 = vrot.lane.b32.xlu0 %v1331, 16
    %v1417 = vpop.permute.xlu0 %1416
    %1420 = vrot.lane.b32.xlu0 %v1409, 24
    %v1421 = vpop.permute.xlu0 %1420
    %v1423 = vsel %vm79, %v1175, %v1413
    %v1424 = vsel %vm401, %v1423, %v1417
    %v1425 = vsel %vm403, %v1424, %v1421
    %v1427 = vsel %vm52, %v1425, 0
    %1429 = vmatpush.msra.mxu0 0.0
    %1430 = vmatpush.msra.mxu0 0.0
    %1431 = vmatpush.msra.mxu0 0.0
    %1432 = vmatpush.msra.mxu0 0.0
    %1433 = vmatpush.msra.mxu0 0.0
    %1434 = vmatpush.msra.mxu0 0.0
    %1435 = vmatpush.msra.mxu0 0.0
    %1436 = vmatpush.msra.mxu0 0.0
    %1437 = vmatpush.msra.mxu0 0.0
    %1438 = vmatpush.msra.mxu0 0.0
    %1439 = vmatpush.msra.mxu0 0.0
    %1440 = vmatpush.msra.mxu0 0.0
    %1441 = vmatpush.msra.mxu0 %v416
    %1442 = vmatpush.msra.mxu0 %v414
    %1443 = vmatpush.msra.mxu0 %v412
    %1444 = vmatpush.msra.mxu0 %v410
    %1445 = vmatmul.f32.gmra.mxu0 %v1427
    %v1446 = vpop.f32.mrf.mxu0
    %v1447 = vadd.f32 %v422, %v1446
    %1448 = vdwg.mxu0
    %v1449 = vadd.f32 %v1073, %v1447
    %v1450 = vsel %vm52, %v1449, 0.0
    %1451 = vadd.xlane.f32.xlu0 %v1450
    %v1452 = vpop.xlane.xlu0 %1451
    %v1453 = vmul.f32 %v1452, %v457
    %v1454 = vsub.f32 %v1449, %v1453
    %v1455 = vmul.f32 %v1454, %v1454
    %v1456 = vsel %vm52, %v1455, 0.0
    %1457 = vadd.xlane.f32.xlu0 %v1456
    %v1458 = vpop.xlane.xlu0 %1457
    %v1459 = vmul.f32 %v1458, %v457
    %v1460 = vadd.f32 %v1459, 1e-05
    %v1461 = vrsqrt.pop %v1460
    %v1462 = vmul.f32 %v1461, %v1460
    %v1463 = vmul.f32 %v1462, %v1461
    %v1464 = vmul.f32 0.5, %v1463
    %v1465 = vsub.f32 1.5, %v1464
    %v1466 = vmul.f32 %v1461, %v1465
    %vm1467 = vweird.f32 %v1460
    %vm1468 = vweird.f32 %v1461
    %vm1469 = vmor %vm1467, %vm1468
    %v1470 = vsel %vm1469, %v1461, %v1466
    %v1471 = vmul.f32 %v1454, %v1470
    %v1472 = vmul.f32 %v1471, %v480
    %v1473 = vadd.f32 %v1472, %v484
    %v1475 = vsel %vm52, %v1473, 0
    %1477 = vmatpush.msra.mxu0 0.0
    %1478 = vmatpush.msra.mxu0 0.0
    %1479 = vmatpush.msra.mxu0 0.0
    %1480 = vmatpush.msra.mxu0 0.0
    %1481 = vmatpush.msra.mxu0 0.0
    %1482 = vmatpush.msra.mxu0 0.0
    %1483 = vmatpush.msra.mxu0 0.0
    %1484 = vmatpush.msra.mxu0 0.0
    %1485 = vmatpush.msra.mxu0 0.0
    %1486 = vmatpush.msra.mxu0 0.0
    %1487 = vmatpush.msra.mxu0 0.0
    %1488 = vmatpush.msra.mxu0 0.0
    %1489 = vmatpush.msra.mxu0 %v28
    %1490 = vmatpush.msra.mxu0 %v27
    %1491 = vmatpush.msra.mxu0 %v26
    %1492 = vmatpush.msra.mxu0 %v25
    %1493 = vmatmul.f32.gmra.mxu0 %v1475
    %v1494 = vpop.f32.mrf.mxu0
    %v1495 = vadd.f32 %v488, %v1494
    %1496 = vdwg.mxu0
    %v1498 = vsel %vm52, %v1075, 0
    %v1501 = vsel %vm52, %v1076, 0
    %1503 = vmatpush.msra.mxu0 0.0
    %1504 = vmatpush.msra.mxu0 0.0
    %1505 = vmatpush.msra.mxu0 0.0
    %1506 = vmatpush.msra.mxu0 0.0
    %1507 = vmatpush.msra.mxu0 0.0
    %1508 = vmatpush.msra.mxu0 0.0
    %1509 = vmatpush.msra.mxu0 0.0
    %1510 = vmatpush.msra.mxu0 0.0
    %1511 = vmatpush.msra.mxu0 0.0
    %1512 = vmatpush.msra.mxu0 0.0
    %1513 = vmatpush.msra.mxu0 0.0
    %1514 = vmatpush.msra.mxu0 0.0
    %1515 = vmatpush.msra.mxu0 %v524
    %1516 = vmatpush.msra.mxu0 %v522
    %1517 = vmatpush.msra.mxu0 %v520
    %1518 = vmatpush.msra.mxu0 %v518
    %1519 = vmatmul.f32.gmra.mxu0 %v1498
    %v1520 = vpop.f32.mrf.mxu0
    %v1521 = vadd.f32 %v530, %v1520
    %1522 = vmatmul.f32.gmra.mxu0 %v1501
    %v1523 = vpop.f32.mrf.mxu0
    %v1524 = vadd.f32 %v530, %v1523
    %1525 = vdwg.mxu0
    %v1527 = vsel %vm79, %v1495, 0
    %v1530 = vsel %vm79, %v1521, 0
    %v1533 = vsel %vm79, %v1524, 0
    %1535 = vmatpush.xpose.msra.mxu0 0.0
    %1536 = vmatpush.xpose.msra.mxu0 0.0
    %1537 = vmatpush.xpose.msra.mxu0 0.0
    %1538 = vmatpush.xpose.msra.mxu0 0.0
    %1539 = vmatpush.xpose.msra.mxu0 0.0
    %1540 = vmatpush.xpose.msra.mxu0 0.0
    %1541 = vmatpush.xpose.msra.mxu0 0.0
    %1542 = vmatpush.xpose.msra.mxu0 0.0
    %1543 = vmatpush.xpose.msra.mxu0 0.0
    %1544 = vmatpush.xpose.msra.mxu0 0.0
    %1545 = vmatpush.xpose.msra.mxu0 0.0
    %1546 = vmatpush.xpose.msra.mxu0 0.0
    %1547 = vmatpush.xpose.msra.mxu0 0.0
    %1548 = vmatpush.xpose.msra.mxu0 0.0
    %1549 = vmatpush.xpose.msra.mxu0 %v1533
    %1550 = vmatpush.xpose.msra.mxu0 %v1530
    %1551 = vmatmul.f32.gmra.mxu0 %v1527
    %v1552 = vpop.f32.mrf.mxu0
    %v1553 = vadd.f32 0.0, %v1552
    %1554 = vdwg.mxu0
    %v1555 = vsel %vm590, %v1553, -inf
    %1556 = vmax.xlane.f32.xlu0 %v1555
    %v1557 = vpop.xlane.xlu0 %1556
    %v1558 = vsub.f32 %v1553, %v1557
    %v1559 = vmul.f32 %v1558, 1.442695
    %v1560 = vpow.pop %v1559
    %v1561 = vsel %vm590, %v1560, 0.0
    %1562 = vadd.xlane.f32.xlu0 %v1561
    %v1563 = vpop.xlane.xlu0 %1562
    %v1564 = vrcp.pop %v1563
    %v1565 = vmul.f32 %v1563, %v1564
    %v1566 = vsub.f32 1.0, %v1565
    %v1567 = vmul.f32 %v1564, %v1566
    %v1568 = vadd.f32 %v1564, %v1567
    %vm1569 = vweird.f32 %v1563
    %vm1570 = vweird.f32 %v1564
    %vm1571 = vmor %vm1569, %vm1570
    %v1572 = vsel %vm1571, %v1564, %v1568
    %v1573 = vand.u32 2147483647, %v1563
    %vm1574 = vcmp.eq.f32.partialorder %v1573, 8.507059e+37
    %v1575 = vand.u32 %v1563, 2147483648
    %v1576 = vor.u32 1.1754944e-38, %v1575
    %v1577 = vsel %vm1574, %v1576, %v1572
    %v1578 = vmul.f32 %v1560, %v1577
    %1579 = vrot.lane.b32.xlu0 %v1521, 96
    %v1580 = vpop.permute.xlu0 %1579
    %1581 = vrot.lane.b32.xlu0 %v1524, 96
    %v1582 = vpop.permute.xlu0 %1581
    %v1585 = vsel %vm590, %v1578, 0
    %v1587 = vsel %vm623, %v1582, 0
    %1589 = vmatpush.msra.mxu0 0.0
    %1590 = vmatpush.msra.mxu0 0.0
    %1591 = vmatpush.msra.mxu0 0.0
    %1592 = vmatpush.msra.mxu0 0.0
    %1593 = vmatpush.msra.mxu0 0.0
    %1594 = vmatpush.msra.mxu0 0.0
    %1595 = vmatpush.msra.mxu0 0.0
    %1596 = vmatpush.msra.mxu0 0.0
    %1597 = vmatpush.msra.mxu0 0.0
    %1598 = vmatpush.msra.mxu0 0.0
    %1599 = vmatpush.msra.mxu0 0.0
    %1600 = vmatpush.msra.mxu0 0.0
    %1601 = vmatpush.msra.mxu0 0.0
    %1602 = vmatpush.msra.mxu0 0.0
    %1603 = vmatpush.msra.mxu0 %v1587
    %1604 = vmatpush.msra.mxu0 %v1580
    %1605 = vmatmul.f32.gmra.mxu0 %v1585
    %v1606 = vpop.f32.mrf.mxu0
    %v1607 = vadd.f32 0.0, %v1606
    %1608 = vdwg.mxu0
    %1609 = vrot.lane.b32.xlu0 %v1495, 120
    %v1610 = vpop.permute.xlu0 %1609
    %1611 = vrot.lane.b32.xlu0 %v1521, 120
    %v1612 = vpop.permute.xlu0 %1611
    %1613 = vrot.lane.b32.xlu0 %v1524, 120
    %v1614 = vpop.permute.xlu0 %1613
    %v1615 = vsel %vm79, %v1610, 0
    %v1617 = vsel %vm79, %v1612, 0
    %v1619 = vsel %vm79, %v1614, 0
    %1621 = vmatpush.xpose.msra.mxu0 0.0
    %1622 = vmatpush.xpose.msra.mxu0 0.0
    %1623 = vmatpush.xpose.msra.mxu0 0.0
    %1624 = vmatpush.xpose.msra.mxu0 0.0
    %1625 = vmatpush.xpose.msra.mxu0 0.0
    %1626 = vmatpush.xpose.msra.mxu0 0.0
    %1627 = vmatpush.xpose.msra.mxu0 0.0
    %1628 = vmatpush.xpose.msra.mxu0 0.0
    %1629 = vmatpush.xpose.msra.mxu0 0.0
    %1630 = vmatpush.xpose.msra.mxu0 0.0
    %1631 = vmatpush.xpose.msra.mxu0 0.0
    %1632 = vmatpush.xpose.msra.mxu0 0.0
    %1633 = vmatpush.xpose.msra.mxu0 0.0
    %1634 = vmatpush.xpose.msra.mxu0 0.0
    %1635 = vmatpush.xpose.msra.mxu0 %v1619
    %1636 = vmatpush.xpose.msra.mxu0 %v1617
    %1637 = vmatmul.f32.gmra.mxu0 %v1615
    %v1638 = vpop.f32.mrf.mxu0
    %v1639 = vadd.f32 0.0, %v1638
    %1640 = vdwg.mxu0
    %v1641 = vsel %vm590, %v1639, -inf
    %1642 = vmax.xlane.f32.xlu0 %v1641
    %v1643 = vpop.xlane.xlu0 %1642
    %v1644 = vsub.f32 %v1639, %v1643
    %v1645 = vmul.f32 %v1644, 1.442695
    %v1646 = vpow.pop %v1645
    %v1647 = vsel %vm590, %v1646, 0.0
    %1648 = vadd.xlane.f32.xlu0 %v1647
    %v1649 = vpop.xlane.xlu0 %1648
    %v1650 = vrcp.pop %v1649
    %v1651 = vmul.f32 %v1649, %v1650
    %v1652 = vsub.f32 1.0, %v1651
    %v1653 = vmul.f32 %v1650, %v1652
    %v1654 = vadd.f32 %v1650, %v1653
    %vm1655 = vweird.f32 %v1649
    %vm1656 = vweird.f32 %v1650
    %vm1657 = vmor %vm1655, %vm1656
    %v1658 = vsel %vm1657, %v1650, %v1654
    %v1659 = vand.u32 2147483647, %v1649
    %vm1660 = vcmp.eq.f32.partialorder %v1659, 8.507059e+37
    %v1661 = vand.u32 %v1649, 2147483648
    %v1662 = vor.u32 1.1754944e-38, %v1661
    %v1663 = vsel %vm1660, %v1662, %v1658
    %v1664 = vmul.f32 %v1646, %v1663
    %1665 = vrot.lane.b32.xlu0 %v1521, 88
    %v1666 = vpop.permute.xlu0 %1665
    %1667 = vrot.lane.b32.xlu0 %v1524, 88
    %v1668 = vpop.permute.xlu0 %1667
    %v1671 = vsel %vm590, %v1664, 0
    %v1673 = vsel %vm623, %v1668, 0
    %1675 = vmatpush.msra.mxu0 0.0
    %1676 = vmatpush.msra.mxu0 0.0
    %1677 = vmatpush.msra.mxu0 0.0
    %1678 = vmatpush.msra.mxu0 0.0
    %1679 = vmatpush.msra.mxu0 0.0
    %1680 = vmatpush.msra.mxu0 0.0
    %1681 = vmatpush.msra.mxu0 0.0
    %1682 = vmatpush.msra.mxu0 0.0
    %1683 = vmatpush.msra.mxu0 0.0
    %1684 = vmatpush.msra.mxu0 0.0
    %1685 = vmatpush.msra.mxu0 0.0
    %1686 = vmatpush.msra.mxu0 0.0
    %1687 = vmatpush.msra.mxu0 0.0
    %1688 = vmatpush.msra.mxu0 0.0
    %1689 = vmatpush.msra.mxu0 %v1673
    %1690 = vmatpush.msra.mxu0 %v1666
    %1691 = vmatmul.f32.gmra.mxu0 %v1671
    %v1692 = vpop.f32.mrf.mxu0
    %v1693 = vadd.f32 0.0, %v1692
    %1694 = vdwg.mxu0
    %1695 = vrot.lane.b32.xlu0 %v1495, 112
    %v1696 = vpop.permute.xlu0 %1695
    %1697 = vrot.lane.b32.xlu0 %v1521, 112
    %v1698 = vpop.permute.xlu0 %1697
    %1699 = vrot.lane.b32.xlu0 %v1524, 112
    %v1700 = vpop.permute.xlu0 %1699
    %v1701 = vsel %vm79, %v1696, 0
    %v1703 = vsel %vm79, %v1698, 0
    %v1705 = vsel %vm79, %v1700, 0
    %1707 = vmatpush.xpose.msra.mxu0 0.0
    %1708 = vmatpush.xpose.msra.mxu0 0.0
    %1709 = vmatpush.xpose.msra.mxu0 0.0
    %1710 = vmatpush.xpose.msra.mxu0 0.0
    %1711 = vmatpush.xpose.msra.mxu0 0.0
    %1712 = vmatpush.xpose.msra.mxu0 0.0
    %1713 = vmatpush.xpose.msra.mxu0 0.0
    %1714 = vmatpush.xpose.msra.mxu0 0.0
    %1715 = vmatpush.xpose.msra.mxu0 0.0
    %1716 = vmatpush.xpose.msra.mxu0 0.0
    %1717 = vmatpush.xpose.msra.mxu0 0.0
    %1718 = vmatpush.xpose.msra.mxu0 0.0
    %1719 = vmatpush.xpose.msra.mxu0 0.0
    %1720 = vmatpush.xpose.msra.mxu0 0.0
    %1721 = vmatpush.xpose.msra.mxu0 %v1705
    %1722 = vmatpush.xpose.msra.mxu0 %v1703
    %1723 = vmatmul.f32.gmra.mxu0 %v1701
    %v1724 = vpop.f32.mrf.mxu0
    %v1725 = vadd.f32 0.0, %v1724
    %1726 = vdwg.mxu0
    %v1727 = vsel %vm590, %v1725, -inf
    %1728 = vmax.xlane.f32.xlu0 %v1727
    %v1729 = vpop.xlane.xlu0 %1728
    %v1730 = vsub.f32 %v1725, %v1729
    %v1731 = vmul.f32 %v1730, 1.442695
    %v1732 = vpow.pop %v1731
    %v1733 = vsel %vm590, %v1732, 0.0
    %1734 = vadd.xlane.f32.xlu0 %v1733
    %v1735 = vpop.xlane.xlu0 %1734
    %v1736 = vrcp.pop %v1735
    %v1737 = vmul.f32 %v1735, %v1736
    %v1738 = vsub.f32 1.0, %v1737
    %v1739 = vmul.f32 %v1736, %v1738
    %v1740 = vadd.f32 %v1736, %v1739
    %vm1741 = vweird.f32 %v1735
    %vm1742 = vweird.f32 %v1736
    %vm1743 = vmor %vm1741, %vm1742
    %v1744 = vsel %vm1743, %v1736, %v1740
    %v1745 = vand.u32 2147483647, %v1735
    %vm1746 = vcmp.eq.f32.partialorder %v1745, 8.507059e+37
    %v1747 = vand.u32 %v1735, 2147483648
    %v1748 = vor.u32 1.1754944e-38, %v1747
    %v1749 = vsel %vm1746, %v1748, %v1744
    %v1750 = vmul.f32 %v1732, %v1749
    %1751 = vrot.lane.b32.xlu0 %v1521, 80
    %v1752 = vpop.permute.xlu0 %1751
    %1753 = vrot.lane.b32.xlu0 %v1524, 80
    %v1754 = vpop.permute.xlu0 %1753
    %v1757 = vsel %vm590, %v1750, 0
    %v1759 = vsel %vm623, %v1754, 0
    %1761 = vmatpush.msra.mxu0 0.0
    %1762 = vmatpush.msra.mxu0 0.0
    %1763 = vmatpush.msra.mxu0 0.0
    %1764 = vmatpush.msra.mxu0 0.0
    %1765 = vmatpush.msra.mxu0 0.0
    %1766 = vmatpush.msra.mxu0 0.0
    %1767 = vmatpush.msra.mxu0 0.0
    %1768 = vmatpush.msra.mxu0 0.0
    %1769 = vmatpush.msra.mxu0 0.0
    %1770 = vmatpush.msra.mxu0 0.0
    %1771 = vmatpush.msra.mxu0 0.0
    %1772 = vmatpush.msra.mxu0 0.0
    %1773 = vmatpush.msra.mxu0 0.0
    %1774 = vmatpush.msra.mxu0 0.0
    %1775 = vmatpush.msra.mxu0 %v1759
    %1776 = vmatpush.msra.mxu0 %v1752
    %1777 = vmatmul.f32.gmra.mxu0 %v1757
    %v1778 = vpop.f32.mrf.mxu0
    %v1779 = vadd.f32 0.0, %v1778
    %1780 = vdwg.mxu0
    %1781 = vrot.lane.b32.xlu0 %v1495, 104
    %v1782 = vpop.permute.xlu0 %1781
    %1783 = vrot.lane.b32.xlu0 %v1521, 104
    %v1784 = vpop.permute.xlu0 %1783
    %1785 = vrot.lane.b32.xlu0 %v1524, 104
    %v1786 = vpop.permute.xlu0 %1785
    %v1787 = vsel %vm79, %v1782, 0
    %v1789 = vsel %vm79, %v1784, 0
    %v1791 = vsel %vm79, %v1786, 0
    %1793 = vmatpush.xpose.msra.mxu0 0.0
    %1794 = vmatpush.xpose.msra.mxu0 0.0
    %1795 = vmatpush.xpose.msra.mxu0 0.0
    %1796 = vmatpush.xpose.msra.mxu0 0.0
    %1797 = vmatpush.xpose.msra.mxu0 0.0
    %1798 = vmatpush.xpose.msra.mxu0 0.0
    %1799 = vmatpush.xpose.msra.mxu0 0.0
    %1800 = vmatpush.xpose.msra.mxu0 0.0
    %1801 = vmatpush.xpose.msra.mxu0 0.0
    %1802 = vmatpush.xpose.msra.mxu0 0.0
    %1803 = vmatpush.xpose.msra.mxu0 0.0
    %1804 = vmatpush.xpose.msra.mxu0 0.0
    %1805 = vmatpush.xpose.msra.mxu0 0.0
    %1806 = vmatpush.xpose.msra.mxu0 0.0
    %1807 = vmatpush.xpose.msra.mxu0 %v1791
    %1808 = vmatpush.xpose.msra.mxu0 %v1789
    %1809 = vmatmul.f32.gmra.mxu0 %v1787
    %v1810 = vpop.f32.mrf.mxu0
    %v1811 = vadd.f32 0.0, %v1810
    %1812 = vdwg.mxu0
    %v1813 = vsel %vm590, %v1811, -inf
    %1814 = vmax.xlane.f32.xlu0 %v1813
    %v1815 = vpop.xlane.xlu0 %1814
    %v1816 = vsub.f32 %v1811, %v1815
    %v1817 = vmul.f32 %v1816, 1.442695
    %v1818 = vpow.pop %v1817
    %v1819 = vsel %vm590, %v1818, 0.0
    %1820 = vadd.xlane.f32.xlu0 %v1819
    %v1821 = vpop.xlane.xlu0 %1820
    %v1822 = vrcp.pop %v1821
    %v1823 = vmul.f32 %v1821, %v1822
    %v1824 = vsub.f32 1.0, %v1823
    %v1825 = vmul.f32 %v1822, %v1824
    %v1826 = vadd.f32 %v1822, %v1825
    %vm1827 = vweird.f32 %v1821
    %vm1828 = vweird.f32 %v1822
    %vm1829 = vmor %vm1827, %vm1828
    %v1830 = vsel %vm1829, %v1822, %v1826
    %v1831 = vand.u32 2147483647, %v1821
    %vm1832 = vcmp.eq.f32.partialorder %v1831, 8.507059e+37
    %v1833 = vand.u32 %v1821, 2147483648
    %v1834 = vor.u32 1.1754944e-38, %v1833
    %v1835 = vsel %vm1832, %v1834, %v1830
    %v1836 = vmul.f32 %v1818, %v1835
    %1837 = vrot.lane.b32.xlu0 %v1521, 72
    %v1838 = vpop.permute.xlu0 %1837
    %1839 = vrot.lane.b32.xlu0 %v1524, 72
    %v1840 = vpop.permute.xlu0 %1839
    %v1843 = vsel %vm590, %v1836, 0
    %v1845 = vsel %vm623, %v1840, 0
    %1847 = vmatpush.msra.mxu0 0.0
    %1848 = vmatpush.msra.mxu0 0.0
    %1849 = vmatpush.msra.mxu0 0.0
    %1850 = vmatpush.msra.mxu0 0.0
    %1851 = vmatpush.msra.mxu0 0.0
    %1852 = vmatpush.msra.mxu0 0.0
    %1853 = vmatpush.msra.mxu0 0.0
    %1854 = vmatpush.msra.mxu0 0.0
    %1855 = vmatpush.msra.mxu0 0.0
    %1856 = vmatpush.msra.mxu0 0.0
    %1857 = vmatpush.msra.mxu0 0.0
    %1858 = vmatpush.msra.mxu0 0.0
    %1859 = vmatpush.msra.mxu0 0.0
    %1860 = vmatpush.msra.mxu0 0.0
    %1861 = vmatpush.msra.mxu0 %v1845
    %1862 = vmatpush.msra.mxu0 %v1838
    %1863 = vmatmul.f32.gmra.mxu0 %v1843
    %v1864 = vpop.f32.mrf.mxu0
    %v1865 = vadd.f32 0.0, %v1864
    %1866 = vdwg.mxu0
    %1868 = vrot.lane.b32.xlu0 %v1693, 8
    %v1869 = vpop.permute.xlu0 %1868
    %1872 = vrot.lane.b32.xlu0 %v1779, 16
    %v1873 = vpop.permute.xlu0 %1872
    %1876 = vrot.lane.b32.xlu0 %v1865, 24
    %v1877 = vpop.permute.xlu0 %1876
    %v1879 = vsel %vm79, %v1607, %v1869
    %v1880 = vsel %vm401, %v1879, %v1873
    %v1881 = vsel %vm403, %v1880, %v1877
    %v1883 = vsel %vm52, %v1881, 0
    %1885 = vmatpush.msra.mxu0 0.0
    %1886 = vmatpush.msra.mxu0 0.0
    %1887 = vmatpush.msra.mxu0 0.0
    %1888 = vmatpush.msra.mxu0 0.0
    %1889 = vmatpush.msra.mxu0 0.0
    %1890 = vmatpush.msra.mxu0 0.0
    %1891 = vmatpush.msra.mxu0 0.0
    %1892 = vmatpush.msra.mxu0 0.0
    %1893 = vmatpush.msra.mxu0 0.0
    %1894 = vmatpush.msra.mxu0 0.0
    %1895 = vmatpush.msra.mxu0 0.0
    %1896 = vmatpush.msra.mxu0 0.0
    %1897 = vmatpush.msra.mxu0 %v926
    %1898 = vmatpush.msra.mxu0 %v924
    %1899 = vmatpush.msra.mxu0 %v922
    %1900 = vmatpush.msra.mxu0 %v920
    %1901 = vmatmul.f32.gmra.mxu0 %v1883
    %v1902 = vpop.f32.mrf.mxu0
    %v1903 = vadd.f32 %v932, %v1902
    %1904 = vdwg.mxu0
    %v1905 = vadd.f32 %v1473, %v1903
    %v1906 = vsel %vm52, %v1905, 0.0
    %1907 = vadd.xlane.f32.xlu0 %v1906
    %v1908 = vpop.xlane.xlu0 %1907
    %v1909 = vmul.f32 %v1908, %v457
    %v1910 = vsub.f32 %v1905, %v1909
    %v1911 = vmul.f32 %v1910, %v1910
    %v1912 = vsel %vm52, %v1911, 0.0
    %1913 = vadd.xlane.f32.xlu0 %v1912
    %v1914 = vpop.xlane.xlu0 %1913
    %v1915 = vmul.f32 %v1914, %v457
    %v1916 = vadd.f32 %v1915, 1e-05
    %v1917 = vrsqrt.pop %v1916
    %v1918 = vmul.f32 %v1917, %v1916
    %v1919 = vmul.f32 %v1918, %v1917
    %v1920 = vmul.f32 0.5, %v1919
    %v1921 = vsub.f32 1.5, %v1920
    %v1922 = vmul.f32 %v1917, %v1921
    %vm1923 = vweird.f32 %v1916
    %vm1924 = vweird.f32 %v1917
    %vm1925 = vmor %vm1923, %vm1924
    %v1926 = vsel %vm1925, %v1917, %v1922
    %v1927 = vmul.f32 %v1910, %v1926
    %v1928 = vmul.f32 %v1927, %v981
    %v1929 = vadd.f32 %v1928, %v985
    %v1931 = vsel %vm52, %v1929, 0
    %1933 = vmatpush.msra.mxu0 0.0
    %1934 = vmatpush.msra.mxu0 0.0
    %1935 = vmatpush.msra.mxu0 0.0
    %1936 = vmatpush.msra.mxu0 0.0
    %1937 = vmatpush.msra.mxu0 0.0
    %1938 = vmatpush.msra.mxu0 0.0
    %1939 = vmatpush.msra.mxu0 0.0
    %1940 = vmatpush.msra.mxu0 0.0
    %1941 = vmatpush.msra.mxu0 0.0
    %1942 = vmatpush.msra.mxu0 0.0
    %1943 = vmatpush.msra.mxu0 0.0
    %1944 = vmatpush.msra.mxu0 0.0
    %1945 = vmatpush.msra.mxu0 %v32
    %1946 = vmatpush.msra.mxu0 %v31
    %1947 = vmatpush.msra.mxu0 %v30
    %1948 = vmatpush.msra.mxu0 %v29
    %1949 = vmatmul.f32.gmra.mxu0 %v1931
    %v1950 = vpop.f32.mrf.mxu0
    %v1951 = vadd.f32 %v478, %v1950
    %1952 = vdwg.mxu0
    %v1953 = vmax.f32 %v1951, 0.0
    %v1955 = vsel %vm1016, %v1953, 0
    %1957 = vmatpush.msra.mxu0 0.0
    %1958 = vmatpush.msra.mxu0 0.0
    %1959 = vmatpush.msra.mxu0 0.0
    %1960 = vmatpush.msra.mxu0 0.0
    %1961 = vmatpush.msra.mxu0 0.0
    %1962 = vmatpush.msra.mxu0 0.0
    %1963 = vmatpush.msra.mxu0 0.0
    %1964 = vmatpush.msra.mxu0 0.0
    %1965 = vmatpush.msra.mxu0 %v45
    %1966 = vmatpush.msra.mxu0 %v44
    %1967 = vmatpush.msra.mxu0 %v43
    %1968 = vmatpush.msra.mxu0 %v42
    %1969 = vmatpush.msra.mxu0 %v41
    %1970 = vmatpush.msra.mxu0 %v40
    %1971 = vmatpush.msra.mxu0 %v39
    %1972 = vmatpush.msra.mxu0 %v38
    %1973 = vmatmul.f32.gmra.mxu0 %v1955
    %v1974 = vpop.f32.mrf.mxu0
    %v1975 = vadd.f32 %v1014, %v1974
    %1976 = vdwg.mxu0
    %v1977 = vadd.f32 %v1929, %v1975
    %v1978 = vsel %vm52, %v1977, 0.0
    %1979 = vadd.xlane.f32.xlu0 %v1978
    %v1980 = vpop.xlane.xlu0 %1979
    %v1981 = vmul.f32 %v1980, %v457
    %v1982 = vsub.f32 %v1977, %v1981
    %v1983 = vmul.f32 %v1982, %v1982
    %v1984 = vsel %vm52, %v1983, 0.0
    %1985 = vadd.xlane.f32.xlu0 %v1984
    %v1986 = vpop.xlane.xlu0 %1985
    %v1987 = vmul.f32 %v1986, %v457
    %v1988 = vadd.f32 %v1987, 1e-05
    %v1989 = vrsqrt.pop %v1988
    %v1990 = vmul.f32 %v1989, %v1988
    %v1991 = vmul.f32 %v1990, %v1989
    %v1992 = vmul.f32 0.5, %v1991
    %v1993 = vsub.f32 1.5, %v1992
    %v1994 = vmul.f32 %v1989, %v1993
    %vm1995 = vweird.f32 %v1988
    %vm1996 = vweird.f32 %v1989
    %vm1997 = vmor %vm1995, %vm1996
    %v1998 = vsel %vm1997, %v1989, %v1994
    %v1999 = vmul.f32 %v1982, %v1998
    %v2000 = vmul.f32 %v1999, %v1064
    %v2001 = vadd.f32 %v2000, %v1068
    %s2002 = scalar_lea.vmem [#allocation2], 8
    %2003 = vst.msk [vmem:[%s2002] sm:$0xff] %vm52, %v2001
    // Predicated region
    $region22: #{_lambda_.1} parent=1 // pred_check
      _
    $region23: #{_lambda_.1} parent=1 // pred_check_branch
      %2005 = sbr.rel (0) target = $region25
    $region24: #{_lambda_.1} parent=1 // pred_region
      %2007 = vsyncadd [#allocation3], 0
      %s2008 = sshll.u32 [#allocation2], 4
      %s2009 = int_to_ptr.vmem [resolvable:$true] %s2008
      %s2010 = sshll.u32 %s5, 4
      %s2011 = int_to_ptr.hbm [resolvable:$true] %s2010
      %2016 = dma.vmem_to_hbm [thread:$0]  %s2009, 256, %s2011, [#allocation3], 128, 128, 8
    $region25: #{_lambda_.1} parent=1 // pred_fallthru
      _
    // Predicated region
    $region26: #{_lambda_.1} parent=1 // pred_check
      _
    $region27: #{_lambda_.1} parent=1 // pred_check_branch
      %2018 = sbr.rel (0) target = $region29
    $region28: #{_lambda_.1} parent=1 // pred_region
      %2020 = dma.done [#allocation3], 256
    $region29: #{_lambda_.1} parent=1 // pred_fallthru
      _
    %2021 = vsyncpa [#allocation3], 1

</llo_original>
